<compile_context>
chip_gen: v6e
topology: v6e:2x2x1
jax: 0.10.0
libtpu: 0.0.40
codegen_flags: <defaults>
</compile_context>

<pallas_src>
import functools

import jax
import jax.numpy as jnp
from jax import lax
from jax.experimental import pallas as pl
from jax.experimental.pallas import tpu as pltpu


def _encoder_kernel(src_ref,
                    wqkv_ref, bqkv_ref, wo_ref, bo_ref,
                    w1_ref, b1_ref, w2_ref, b2_ref,
                    g1_ref, be1_ref, g2_ref, be2_ref,
                    *refs,
                    nhead, seq_len, compute_dtype, need_weights):
    if need_weights:
        out_ref, attnw_ref, qkv_scr, ctx_scr = refs
    else:
        out_ref, qkv_scr, ctx_scr = refs
        attnw_ref = None

    M, D = src_ref.shape          # M = block_b * seq_len rows
    S = seq_len
    Bb = M // S
    Dh = D // nhead
    eps = 1e-5
    cdt = compute_dtype

    x = src_ref[...]              # (M, D) f32 — residual path stays f32

    # ---- fused QKV in-projection: one MXU matmul (scale pre-folded into Q) --
    qkv = jnp.dot(x.astype(cdt), wqkv_ref[...],
                  preferred_element_type=jnp.float32) + bqkv_ref[...]
    qkv_scr[...] = qkv.astype(cdt)

    inv_h = 1.0 / nhead

    # ---- per-(batch, head) scaled dot-product attention ---------------------
    # Batch-within-block via fori_loop (bounded live ranges per sequence);
    # heads stay a static loop so lane offsets are static slices.
    def bb_body(bb, carry):
        r0 = pl.multiple_of(bb * S, S)
        attn_sum = jnp.zeros((S, S), jnp.float32) if need_weights else None
        for h in range(nhead):
            c0 = h * Dh
            qh = qkv_scr[pl.ds(r0, S), pl.ds(c0, Dh)]          # already scaled
            kh = qkv_scr[pl.ds(r0, S), pl.ds(D + c0, Dh)]
            vh = qkv_scr[pl.ds(r0, S), pl.ds(2 * D + c0, Dh)]
            # Q @ K^T via dot_general contracting the head dim (no transpose).
            s = lax.dot_general(qh, kh, (((1,), (1,)), ((), ())),
                                preferred_element_type=jnp.float32)
            s = s - jnp.max(s, axis=-1, keepdims=True)
            e = jnp.exp(s)
            # EUP reciprocal instead of a VALU divide.
            p = e * pl.reciprocal(jnp.sum(e, axis=-1, keepdims=True),
                                  approx=True)
            if need_weights:
                attn_sum = attn_sum + p
            ctx = jnp.dot(p.astype(cdt), vh,
                          preferred_element_type=jnp.float32)
            # Write the head's context at its lane offset; the output
            # projection is done once, with K = D, after the loop.
            ctx_scr[pl.ds(r0, S), pl.ds(c0, Dh)] = ctx.astype(cdt)
        if need_weights:
            # Head-averaged weights (PyTorch average_attn_weights=True).
            attnw_ref[bb] = attn_sum * inv_h
        return carry

    lax.fori_loop(0, Bb, bb_body, 0)

    # ---- single full-width output projection (K = D) ------------------------
    attn_out = jnp.dot(ctx_scr[...], wo_ref[...],
                       preferred_element_type=jnp.float32) + bo_ref[...]

    # ---- residual + LayerNorm 1 (dropout2 == identity) ----------------------
    h1 = x + attn_out
    mu1 = jnp.mean(h1, axis=-1, keepdims=True)
    var1 = jnp.mean(h1 * h1, axis=-1, keepdims=True) - mu1 * mu1
    h1n = (h1 - mu1) * lax.rsqrt(var1 + eps) * g1_ref[...] + be1_ref[...]

    # ---- feed-forward (dropout1 == identity) --------------------------------
    ff = jnp.dot(h1n.astype(cdt), w1_ref[...],
                 preferred_element_type=jnp.float32) + b1_ref[...]
    ff = jnp.maximum(ff, 0.0)
    ff = jnp.dot(ff.astype(cdt), w2_ref[...],
                 preferred_element_type=jnp.float32) + b2_ref[...]

    # ---- residual + LayerNorm 2 (dropout3 == identity) ----------------------
    h2 = h1n + ff
    mu2 = jnp.mean(h2, axis=-1, keepdims=True)
    var2 = jnp.mean(h2 * h2, axis=-1, keepdims=True) - mu2 * mu2
    out_ref[...] = (h2 - mu2) * lax.rsqrt(var2 + eps) * g2_ref[...] + be2_ref[...]


def pack_params(params, *, nhead, matmul_dtype=jnp.bfloat16):
    """One-time weight packing: fuse QKV, fold 1/sqrt(Dh) into Q, cast to
    the MXU operand dtype. Call once, outside the per-step path."""
    D = params["wq"].shape[0]
    Dh = D // nhead
    scale = 1.0 / (Dh ** 0.5)
    wqkv = jnp.concatenate(
        [params["wq"] * scale, params["wk"], params["wv"]], axis=1
    ).astype(matmul_dtype)
    bqkv = jnp.concatenate(
        [params["bq"] * scale, params["bk"], params["bv"]], axis=1
    ).astype(jnp.float32)
    return {
        "wqkv": wqkv, "bqkv": bqkv,
        "wo": params["wo"].astype(matmul_dtype),
        "bo": params["bo"].astype(jnp.float32),
        "w1": params["w1"].astype(matmul_dtype),
        "b1": params["b1"].astype(jnp.float32),
        "w2": params["w2"].astype(matmul_dtype),
        "b2": params["b2"].astype(jnp.float32),
        "g1": params["g1"].astype(jnp.float32),
        "be1": params["be1"].astype(jnp.float32),
        "g2": params["g2"].astype(jnp.float32),
        "be2": params["be2"].astype(jnp.float32),
    }


def custom_encoder_layer(src, packed, *, nhead, block_b=None,
                         need_weights=False):
    """src: (B, S, D) float32; packed: output of pack_params().

    Returns (out (B,S,D), attn_weights (B,S,S)) if need_weights else out.
    """
    B, S, D = src.shape
    F = packed["w1"].shape[1]
    cdt = packed["wqkv"].dtype
    if block_b is None:
        # >= 2 grid steps so the parallel axis shards across v7x's 2 TCs.
        block_b = max(1, B // 2)
    assert B % block_b == 0, "block_b must divide batch"
    M = block_b * S

    src2 = src.reshape(B * S, D)   # fold batch into sublane rows

    def wspec(shape):
        # Constant index_map across the grid -> single-buffer the weights.
        return pl.BlockSpec(shape, lambda b: (0,) * len(shape),
                            pipeline_mode=pl.Buffered(1))

    in_specs = [
        pl.BlockSpec((M, D), lambda b: (b, 0)),              # src rows
        wspec((D, 3 * D)), wspec((1, 3 * D)),                # fused wqkv, bqkv
        wspec((D, D)), wspec((1, D)),                        # wo, bo
        wspec((D, F)), wspec((1, F)),                        # w1, b1
        wspec((F, D)), wspec((1, D)),                        # w2, b2
        wspec((1, D)), wspec((1, D)),                        # norm1 gamma, beta
        wspec((1, D)), wspec((1, D)),                        # norm2 gamma, beta
    ]
    out_specs = [pl.BlockSpec((M, D), lambda b: (b, 0))]
    out_shapes = [jax.ShapeDtypeStruct((B * S, D), jnp.float32)]
    if need_weights:
        out_specs.append(pl.BlockSpec((block_b, S, S), lambda b: (b, 0, 0)))
        out_shapes.append(jax.ShapeDtypeStruct((B, S, S), jnp.float32))

    kernel = functools.partial(_encoder_kernel, nhead=nhead, seq_len=S,
                               compute_dtype=cdt, need_weights=need_weights)
    outs = pl.pallas_call(
        kernel,
        out_shape=tuple(out_shapes),
        grid=(B // block_b,),
        in_specs=in_specs,
        out_specs=out_specs,
        scratch_shapes=[pltpu.VMEM((M, 3 * D), cdt),   # qkv scratch
                        pltpu.VMEM((M, D), cdt)],      # ctx scratch
        compiler_params=pltpu.CompilerParams(
            dimension_semantics=("parallel",),
            vmem_limit_bytes=64 * 1024 * 1024),
    )(
        src2,
        packed["wqkv"], packed["bqkv"],
        packed["wo"], packed["bo"],
        packed["w1"], packed["b1"], packed["w2"], packed["b2"],
        packed["g1"], packed["be1"], packed["g2"], packed["be2"],
    )

    if need_weights:
        out2, attnw = outs
        return out2.reshape(B, S, D), attnw
    out2 = outs[0] if isinstance(outs, (list, tuple)) else outs
    return out2.reshape(B, S, D)


def _reference(src, params, *, nhead):
    """Pure-JAX reference of the same forward (dropout = identity)."""
    B, S, D = src.shape
    Dh = D // nhead
    scale = 1.0 / (Dh ** 0.5)
    eps = 1e-5

    def ln(x, g, b):
        mu = x.mean(-1, keepdims=True)
        var = ((x - mu) ** 2).mean(-1, keepdims=True)
        return (x - mu) / jnp.sqrt(var + eps) * g + b

    q = src @ params["wq"] + params["bq"]
    k = src @ params["wk"] + params["bk"]
    v = src @ params["wv"] + params["bv"]
    qh = q.reshape(B, S, nhead, Dh)
    kh = k.reshape(B, S, nhead, Dh)
    vh = v.reshape(B, S, nhead, Dh)
    s = jnp.einsum("bqhd,bkhd->bhqk", qh, kh) * scale
    p = jax.nn.softmax(s, axis=-1)
    ctx = jnp.einsum("bhqk,bkhd->bqhd", p, vh).reshape(B, S, D)
    attn_out = ctx @ params["wo"] + params["bo"]
    h1 = ln(src + attn_out, params["g1"], params["be1"])
    ff = jnp.maximum(h1 @ params["w1"] + params["b1"], 0.0) @ params["w2"] + params["b2"]
    out = ln(h1 + ff, params["g2"], params["be2"])
    return out, p.mean(axis=1)


def _init_params(key, d_model, nhead, dim_feedforward):
    ks = jax.random.split(key, 12)
    D, F = d_model, dim_feedforward
    # PyTorch packs in_proj_weight (3D, D); slice + transpose to (D, D) each.
    in_proj_w = 0.1 * jax.random.normal(ks[0], (3 * D, D), jnp.float32)
    in_proj_b = 0.1 * jax.random.normal(ks[1], (3 * D,), jnp.float32)
    return {
        "wq": in_proj_w[0 * D:1 * D].T, "bq": in_proj_b[0 * D:1 * D].reshape(1, D),
        "wk": in_proj_w[1 * D:2 * D].T, "bk": in_proj_b[1 * D:2 * D].reshape(1, D),
        "wv": in_proj_w[2 * D:3 * D].T, "bv": in_proj_b[2 * D:3 * D].reshape(1, D),
        "wo": (0.1 * jax.random.normal(ks[2], (D, D), jnp.float32)).T,
        "bo": 0.1 * jax.random.normal(ks[3], (1, D), jnp.float32),
        "w1": (0.1 * jax.random.normal(ks[4], (F, D), jnp.float32)).T,
        "b1": 0.1 * jax.random.normal(ks[5], (1, F), jnp.float32),
        "w2": (0.1 * jax.random.normal(ks[6], (D, F), jnp.float32)).T,
        "b2": 0.1 * jax.random.normal(ks[7], (1, D), jnp.float32),
        "g1": 1.0 + 0.05 * jax.random.normal(ks[8], (1, D), jnp.float32),
        "be1": 0.05 * jax.random.normal(ks[9], (1, D), jnp.float32),
        "g2": 1.0 + 0.05 * jax.random.normal(ks[10], (1, D), jnp.float32),
        "be2": 0.05 * jax.random.normal(ks[11], (1, D), jnp.float32),
    }


if __name__ == "__main__":
    B, S, d_model, nhead, dim_ff = 4, 8, 32, 4, 64

    key = jax.random.PRNGKey(0)
    k_src, k_par = jax.random.split(key)
    src = jax.random.normal(k_src, (B, S, d_model), jnp.float32)
    params = _init_params(k_par, d_model, nhead, dim_ff)

    ref_out, ref_attn = _reference(src, params, nhead=nhead)

    # f32 MXU-operand path with attention weights (tight tolerance; covers
    # the approximate EUP reciprocal in softmax). grid = (2,) -> two steps.
    packed_f32 = pack_params(params, nhead=nhead, matmul_dtype=jnp.float32)
    out, attn_w = custom_encoder_layer(src, packed_f32, nhead=nhead,
                                       need_weights=True)
    out = jax.block_until_ready(out)
    attn_w = jax.block_until_ready(attn_w)
    assert jnp.allclose(out, ref_out, rtol=2e-2, atol=2e-2), "output mismatch (f32)"
    assert jnp.allclose(attn_w, ref_attn, rtol=2e-2, atol=2e-2), "attn_weights mismatch (f32)"

    # Production-default path: bf16 MXU operands, f32 accumulation,
    # need_weights=False (no (B,S,S) HBM writeback). Looser tolerance.
    packed_bf16 = pack_params(params, nhead=nhead)   # bf16 default
    out_bf = custom_encoder_layer(src, packed_bf16, nhead=nhead)
    out_bf = jax.block_until_ready(out_bf)
    assert jnp.allclose(out_bf, ref_out, rtol=8e-2, atol=8e-2), "output mismatch (bf16)"

    print("KERNEL_OK")
</pallas_src>

<mosaic_0001>
module attributes {stable_mosaic.version = 11 : i64} {
  func.func @_encoder_kernel(%arg0: i32, %arg1: memref<16x32xf32, #tpu.memory_space<vmem>>, %arg2: memref<32x96xf32, #tpu.memory_space<vmem>>, %arg3: memref<1x96xf32, #tpu.memory_space<vmem>>, %arg4: memref<32x32xf32, #tpu.memory_space<vmem>>, %arg5: memref<1x32xf32, #tpu.memory_space<vmem>>, %arg6: memref<32x64xf32, #tpu.memory_space<vmem>>, %arg7: memref<1x64xf32, #tpu.memory_space<vmem>>, %arg8: memref<64x32xf32, #tpu.memory_space<vmem>>, %arg9: memref<1x32xf32, #tpu.memory_space<vmem>>, %arg10: memref<1x32xf32, #tpu.memory_space<vmem>>, %arg11: memref<1x32xf32, #tpu.memory_space<vmem>>, %arg12: memref<1x32xf32, #tpu.memory_space<vmem>>, %arg13: memref<1x32xf32, #tpu.memory_space<vmem>>, %arg14: memref<16x32xf32, #tpu.memory_space<vmem>>, %arg15: memref<2x8x8xf32, #tpu.memory_space<vmem>>, %arg16: memref<16x96xf32, #tpu.memory_space<vmem>>, %arg17: memref<16x32xf32, #tpu.memory_space<vmem>>) attributes {dimension_semantics = [#tpu.dimension_semantics<parallel>], iteration_bounds = array<i64: 2>, scalar_prefetch = 0 : i64, scratch_operands = 2 : i64, tpu.core_type = #tpu.core_type<tc>, window_params = [{transform_indices = @transform_0, window_bounds = array<i64: 16, 32>}, {pipeline_mode = #tpu.pipeline_mode<synchronous>, transform_indices = @transform_1, window_bounds = array<i64: 32, 96>}, {pipeline_mode = #tpu.pipeline_mode<synchronous>, transform_indices = @transform_2, window_bounds = array<i64: 1, 96>}, {pipeline_mode = #tpu.pipeline_mode<synchronous>, transform_indices = @transform_3, window_bounds = array<i64: 32, 32>}, {pipeline_mode = #tpu.pipeline_mode<synchronous>, transform_indices = @transform_4, window_bounds = array<i64: 1, 32>}, {pipeline_mode = #tpu.pipeline_mode<synchronous>, transform_indices = @transform_5, window_bounds = array<i64: 32, 64>}, {pipeline_mode = #tpu.pipeline_mode<synchronous>, transform_indices = @transform_6, window_bounds = array<i64: 1, 64>}, {pipeline_mode = #tpu.pipeline_mode<synchronous>, transform_indices = @transform_7, window_bounds = array<i64: 64, 32>}, {pipeline_mode = #tpu.pipeline_mode<synchronous>, transform_indices = @transform_8, window_bounds = array<i64: 1, 32>}, {pipeline_mode = #tpu.pipeline_mode<synchronous>, transform_indices = @transform_9, window_bounds = array<i64: 1, 32>}, {pipeline_mode = #tpu.pipeline_mode<synchronous>, transform_indices = @transform_10, window_bounds = array<i64: 1, 32>}, {pipeline_mode = #tpu.pipeline_mode<synchronous>, transform_indices = @transform_11, window_bounds = array<i64: 1, 32>}, {pipeline_mode = #tpu.pipeline_mode<synchronous>, transform_indices = @transform_12, window_bounds = array<i64: 1, 32>}, {transform_indices = @transform_13, window_bounds = array<i64: 16, 32>}, {transform_indices = @transform_14, window_bounds = array<i64: 2, 8, 8>}]} {
    %c0 = arith.constant 0 : index
    %c0_0 = arith.constant 0 : index
    %0 = vector.load %arg1[%c0, %c0_0] : memref<16x32xf32, #tpu.memory_space<vmem>>, vector<16x32xf32>
    %c0_1 = arith.constant 0 : index
    %c0_2 = arith.constant 0 : index
    %1 = vector.load %arg2[%c0_1, %c0_2] : memref<32x96xf32, #tpu.memory_space<vmem>>, vector<32x96xf32>
    %cst = arith.constant dense<0.000000e+00> : vector<16x96xf32>
    %2 = tpu.matmul %0, %1, %cst {dimension_numbers = #tpu.dot_dimension_numbers<[1], [0], [0], [1], [0, 0, 1, 1], [], []>} : vector<16x32xf32>, vector<32x96xf32>, vector<16x96xf32> -> vector<16x96xf32>
    %c0_3 = arith.constant 0 : index
    %c0_4 = arith.constant 0 : index
    %3 = vector.load %arg3[%c0_3, %c0_4] : memref<1x96xf32, #tpu.memory_space<vmem>>, vector<1x96xf32>
    %4 = vector.broadcast %3 : vector<1x96xf32> to vector<16x96xf32>
    %5 = arith.addf %2, %4 : vector<16x96xf32>
    %c0_5 = arith.constant 0 : index
    %c0_6 = arith.constant 0 : index
    %6 = vector.load %arg16[%c0_5, %c0_6] : memref<16x96xf32, #tpu.memory_space<vmem>>, vector<16x96xf32>
    tpu.vector_store %arg16[%c0_5, %c0_6], %5 {strides = array<i32>} : memref<16x96xf32, #tpu.memory_space<vmem>>, vector<16x96xf32>,
    %c0_i32 = arith.constant 0 : i32
    %c2_i32 = arith.constant 2 : i32
    %7 = arith.addi %c0_i32, %c2_i32 : i32
    %c1_i32 = arith.constant 1 : i32
    scf.for %arg18 = %c0_i32 to %7 step %c1_i32  : i32 {
      %c8_i32 = arith.constant 8 : i32
      %77 = arith.muli %arg18, %c8_i32 : i32
      %78 = tpu.assume_multiple %77, 8 : i32
      %cst_46 = arith.constant 0.000000e+00 : f32
      %79 = vector.broadcast %cst_46 : f32 to vector<8x8xf32>
      %80 = arith.index_cast %78 : i32 to index
      %c0_47 = arith.constant 0 : index
      %81 = vector.load %arg16[%80, %c0_47] : memref<16x96xf32, #tpu.memory_space<vmem>>, vector<8x8xf32>
      %82 = arith.index_cast %78 : i32 to index
      %c32 = arith.constant 32 : index
      %83 = vector.load %arg16[%82, %c32] : memref<16x96xf32, #tpu.memory_space<vmem>>, vector<8x8xf32>
      %84 = arith.index_cast %78 : i32 to index
      %c64 = arith.constant 64 : index
      %85 = vector.load %arg16[%84, %c64] : memref<16x96xf32, #tpu.memory_space<vmem>>, vector<8x8xf32>
      %cst_48 = arith.constant dense<0.000000e+00> : vector<8x8xf32>
      %86 = tpu.matmul %81, %83, %cst_48 {dimension_numbers = #tpu.dot_dimension_numbers<[1], [1], [0], [0], [0, 0, 1, 0], [], []>} : vector<8x8xf32>, vector<8x8xf32>, vector<8x8xf32> -> vector<8x8xf32>
      %cst_49 = arith.constant dense<0xFF800000> : vector<8xf32>
      %87 = vector.multi_reduction <maximumf>, %86, %cst_49 [1] : vector<8x8xf32> to vector<8xf32>
      %88 = vector.shape_cast %87 : vector<8xf32> to vector<8x1xf32>
      %89 = vector.broadcast %88 : vector<8x1xf32> to vector<8x8xf32>
      %90 = arith.subf %86, %89 : vector<8x8xf32>
      %91 = math.exp %90 : vector<8x8xf32>
      %cst_50 = arith.constant dense<0.000000e+00> : vector<8xf32>
      %92 = vector.multi_reduction <add>, %91, %cst_50 [1] : vector<8x8xf32> to vector<8xf32>
      %93 = vector.shape_cast %92 : vector<8xf32> to vector<8x1xf32>
      %94 = tpu.reciprocal %93 {approx = true} : vector<8x1xf32> -> vector<8x1xf32>
      %95 = vector.broadcast %94 : vector<8x1xf32> to vector<8x8xf32>
      %96 = arith.mulf %91, %95 : vector<8x8xf32>
      %97 = arith.addf %79, %96 : vector<8x8xf32>
      %cst_51 = arith.constant dense<0.000000e+00> : vector<8x8xf32>
      %98 = tpu.matmul %96, %85, %cst_51 {dimension_numbers = #tpu.dot_dimension_numbers<[1], [0], [0], [1], [0, 0, 1, 1], [], []>} : vector<8x8xf32>, vector<8x8xf32>, vector<8x8xf32> -> vector<8x8xf32>
      %99 = arith.index_cast %78 : i32 to index
      %c0_52 = arith.constant 0 : index
      %100 = vector.load %arg17[%99, %c0_52] : memref<16x32xf32, #tpu.memory_space<vmem>>, vector<8x8xf32>
      tpu.vector_store %arg17[%99, %c0_52], %98 {strides = array<i32>} : memref<16x32xf32, #tpu.memory_space<vmem>>, vector<8x8xf32>,
      %101 = arith.index_cast %78 : i32 to index
      %c8 = arith.constant 8 : index
      %102 = vector.load %arg16[%101, %c8] : memref<16x96xf32, #tpu.memory_space<vmem>>, vector<8x8xf32>
      %103 = arith.index_cast %78 : i32 to index
      %c40 = arith.constant 40 : index
      %104 = vector.load %arg16[%103, %c40] : memref<16x96xf32, #tpu.memory_space<vmem>>, vector<8x8xf32>
      %105 = arith.index_cast %78 : i32 to index
      %c72 = arith.constant 72 : index
      %106 = vector.load %arg16[%105, %c72] : memref<16x96xf32, #tpu.memory_space<vmem>>, vector<8x8xf32>
      %cst_53 = arith.constant dense<0.000000e+00> : vector<8x8xf32>
      %107 = tpu.matmul %102, %104, %cst_53 {dimension_numbers = #tpu.dot_dimension_numbers<[1], [1], [0], [0], [0, 0, 1, 0], [], []>} : vector<8x8xf32>, vector<8x8xf32>, vector<8x8xf32> -> vector<8x8xf32>
      %cst_54 = arith.constant dense<0xFF800000> : vector<8xf32>
      %108 = vector.multi_reduction <maximumf>, %107, %cst_54 [1] : vector<8x8xf32> to vector<8xf32>
      %109 = vector.shape_cast %108 : vector<8xf32> to vector<8x1xf32>
      %110 = vector.broadcast %109 : vector<8x1xf32> to vector<8x8xf32>
      %111 = arith.subf %107, %110 : vector<8x8xf32>
      %112 = math.exp %111 : vector<8x8xf32>
      %cst_55 = arith.constant dense<0.000000e+00> : vector<8xf32>
      %113 = vector.multi_reduction <add>, %112, %cst_55 [1] : vector<8x8xf32> to vector<8xf32>
      %114 = vector.shape_cast %113 : vector<8xf32> to vector<8x1xf32>
      %115 = tpu.reciprocal %114 {approx = true} : vector<8x1xf32> -> vector<8x1xf32>
      %116 = vector.broadcast %115 : vector<8x1xf32> to vector<8x8xf32>
      %117 = arith.mulf %112, %116 : vector<8x8xf32>
      %118 = arith.addf %97, %117 : vector<8x8xf32>
      %cst_56 = arith.constant dense<0.000000e+00> : vector<8x8xf32>
      %119 = tpu.matmul %117, %106, %cst_56 {dimension_numbers = #tpu.dot_dimension_numbers<[1], [0], [0], [1], [0, 0, 1, 1], [], []>} : vector<8x8xf32>, vector<8x8xf32>, vector<8x8xf32> -> vector<8x8xf32>
      %120 = arith.index_cast %78 : i32 to index
      %c8_57 = arith.constant 8 : index
      %121 = vector.load %arg17[%120, %c8_57] : memref<16x32xf32, #tpu.memory_space<vmem>>, vector<8x8xf32>
      tpu.vector_store %arg17[%120, %c8_57], %119 {strides = array<i32>} : memref<16x32xf32, #tpu.memory_space<vmem>>, vector<8x8xf32>,
      %122 = arith.index_cast %78 : i32 to index
      %c16 = arith.constant 16 : index
      %123 = vector.load %arg16[%122, %c16] : memref<16x96xf32, #tpu.memory_space<vmem>>, vector<8x8xf32>
      %124 = arith.index_cast %78 : i32 to index
      %c48 = arith.constant 48 : index
      %125 = vector.load %arg16[%124, %c48] : memref<16x96xf32, #tpu.memory_space<vmem>>, vector<8x8xf32>
      %126 = arith.index_cast %78 : i32 to index
      %c80 = arith.constant 80 : index
      %127 = vector.load %arg16[%126, %c80] : memref<16x96xf32, #tpu.memory_space<vmem>>, vector<8x8xf32>
      %cst_58 = arith.constant dense<0.000000e+00> : vector<8x8xf32>
      %128 = tpu.matmul %123, %125, %cst_58 {dimension_numbers = #tpu.dot_dimension_numbers<[1], [1], [0], [0], [0, 0, 1, 0], [], []>} : vector<8x8xf32>, vector<8x8xf32>, vector<8x8xf32> -> vector<8x8xf32>
      %cst_59 = arith.constant dense<0xFF800000> : vector<8xf32>
      %129 = vector.multi_reduction <maximumf>, %128, %cst_59 [1] : vector<8x8xf32> to vector<8xf32>
      %130 = vector.shape_cast %129 : vector<8xf32> to vector<8x1xf32>
      %131 = vector.broadcast %130 : vector<8x1xf32> to vector<8x8xf32>
      %132 = arith.subf %128, %131 : vector<8x8xf32>
      %133 = math.exp %132 : vector<8x8xf32>
      %cst_60 = arith.constant dense<0.000000e+00> : vector<8xf32>
      %134 = vector.multi_reduction <add>, %133, %cst_60 [1] : vector<8x8xf32> to vector<8xf32>
      %135 = vector.shape_cast %134 : vector<8xf32> to vector<8x1xf32>
      %136 = tpu.reciprocal %135 {approx = true} : vector<8x1xf32> -> vector<8x1xf32>
      %137 = vector.broadcast %136 : vector<8x1xf32> to vector<8x8xf32>
      %138 = arith.mulf %133, %137 : vector<8x8xf32>
      %139 = arith.addf %118, %138 : vector<8x8xf32>
      %cst_61 = arith.constant dense<0.000000e+00> : vector<8x8xf32>
      %140 = tpu.matmul %138, %127, %cst_61 {dimension_numbers = #tpu.dot_dimension_numbers<[1], [0], [0], [1], [0, 0, 1, 1], [], []>} : vector<8x8xf32>, vector<8x8xf32>, vector<8x8xf32> -> vector<8x8xf32>
      %141 = arith.index_cast %78 : i32 to index
      %c16_62 = arith.constant 16 : index
      %142 = vector.load %arg17[%141, %c16_62] : memref<16x32xf32, #tpu.memory_space<vmem>>, vector<8x8xf32>
      tpu.vector_store %arg17[%141, %c16_62], %140 {strides = array<i32>} : memref<16x32xf32, #tpu.memory_space<vmem>>, vector<8x8xf32>,
      %143 = arith.index_cast %78 : i32 to index
      %c24 = arith.constant 24 : index
      %144 = vector.load %arg16[%143, %c24] : memref<16x96xf32, #tpu.memory_space<vmem>>, vector<8x8xf32>
      %145 = arith.index_cast %78 : i32 to index
      %c56 = arith.constant 56 : index
      %146 = vector.load %arg16[%145, %c56] : memref<16x96xf32, #tpu.memory_space<vmem>>, vector<8x8xf32>
      %147 = arith.index_cast %78 : i32 to index
      %c88 = arith.constant 88 : index
      %148 = vector.load %arg16[%147, %c88] : memref<16x96xf32, #tpu.memory_space<vmem>>, vector<8x8xf32>
      %cst_63 = arith.constant dense<0.000000e+00> : vector<8x8xf32>
      %149 = tpu.matmul %144, %146, %cst_63 {dimension_numbers = #tpu.dot_dimension_numbers<[1], [1], [0], [0], [0, 0, 1, 0], [], []>} : vector<8x8xf32>, vector<8x8xf32>, vector<8x8xf32> -> vector<8x8xf32>
      %cst_64 = arith.constant dense<0xFF800000> : vector<8xf32>
      %150 = vector.multi_reduction <maximumf>, %149, %cst_64 [1] : vector<8x8xf32> to vector<8xf32>
      %151 = vector.shape_cast %150 : vector<8xf32> to vector<8x1xf32>
      %152 = vector.broadcast %151 : vector<8x1xf32> to vector<8x8xf32>
      %153 = arith.subf %149, %152 : vector<8x8xf32>
      %154 = math.exp %153 : vector<8x8xf32>
      %cst_65 = arith.constant dense<0.000000e+00> : vector<8xf32>
      %155 = vector.multi_reduction <add>, %154, %cst_65 [1] : vector<8x8xf32> to vector<8xf32>
      %156 = vector.shape_cast %155 : vector<8xf32> to vector<8x1xf32>
      %157 = tpu.reciprocal %156 {approx = true} : vector<8x1xf32> -> vector<8x1xf32>
      %158 = vector.broadcast %157 : vector<8x1xf32> to vector<8x8xf32>
      %159 = arith.mulf %154, %158 : vector<8x8xf32>
      %160 = arith.addf %139, %159 : vector<8x8xf32>
      %cst_66 = arith.constant dense<0.000000e+00> : vector<8x8xf32>
      %161 = tpu.matmul %159, %148, %cst_66 {dimension_numbers = #tpu.dot_dimension_numbers<[1], [0], [0], [1], [0, 0, 1, 1], [], []>} : vector<8x8xf32>, vector<8x8xf32>, vector<8x8xf32> -> vector<8x8xf32>
      %162 = arith.index_cast %78 : i32 to index
      %c24_67 = arith.constant 24 : index
      %163 = vector.load %arg17[%162, %c24_67] : memref<16x32xf32, #tpu.memory_space<vmem>>, vector<8x8xf32>
      tpu.vector_store %arg17[%162, %c24_67], %161 {strides = array<i32>} : memref<16x32xf32, #tpu.memory_space<vmem>>, vector<8x8xf32>,
      %cst_68 = arith.constant 2.500000e-01 : f32
      %164 = vector.broadcast %cst_68 : f32 to vector<8x8xf32>
      %165 = arith.mulf %160, %164 : vector<8x8xf32>
      %166 = arith.index_cast %arg18 : i32 to index
      %c0_69 = arith.constant 0 : index
      %c0_70 = arith.constant 0 : index
      %167 = vector.load %arg15[%166, %c0_69, %c0_70] : memref<2x8x8xf32, #tpu.memory_space<vmem>>, vector<1x8x8xf32>
      %168 = vector.shape_cast %167 : vector<1x8x8xf32> to vector<8x8xf32>
      %169 = vector.shape_cast %165 : vector<8x8xf32> to vector<1x8x8xf32>
      tpu.vector_store %arg15[%166, %c0_69, %c0_70], %169 {strides = array<i32>} : memref<2x8x8xf32, #tpu.memory_space<vmem>>, vector<1x8x8xf32>,
    }
    %c2_i32_7 = arith.constant 2 : i32
    %c0_8 = arith.constant 0 : index
    %c0_9 = arith.constant 0 : index
    %8 = vector.load %arg17[%c0_8, %c0_9] : memref<16x32xf32, #tpu.memory_space<vmem>>, vector<16x32xf32>
    %c0_10 = arith.constant 0 : index
    %c0_11 = arith.constant 0 : index
    %9 = vector.load %arg4[%c0_10, %c0_11] : memref<32x32xf32, #tpu.memory_space<vmem>>, vector<32x32xf32>
    %cst_12 = arith.constant dense<0.000000e+00> : vector<16x32xf32>
    %10 = tpu.matmul %8, %9, %cst_12 {dimension_numbers = #tpu.dot_dimension_numbers<[1], [0], [0], [1], [0, 0, 1, 1], [], []>} : vector<16x32xf32>, vector<32x32xf32>, vector<16x32xf32> -> vector<16x32xf32>
    %c0_13 = arith.constant 0 : index
    %c0_14 = arith.constant 0 : index
    %11 = vector.load %arg5[%c0_13, %c0_14] : memref<1x32xf32, #tpu.memory_space<vmem>>, vector<1x32xf32>
    %12 = vector.broadcast %11 : vector<1x32xf32> to vector<16x32xf32>
    %13 = arith.addf %10, %12 : vector<16x32xf32>
    %14 = arith.addf %0, %13 : vector<16x32xf32>
    %cst_15 = arith.constant dense<0.000000e+00> : vector<16xf32>
    %15 = vector.multi_reduction <add>, %14, %cst_15 [1] : vector<16x32xf32> to vector<16xf32>
    %16 = vector.shape_cast %15 : vector<16xf32> to vector<16x1xf32>
    %cst_16 = arith.constant 3.200000e+01 : f32
    %17 = vector.broadcast %cst_16 : f32 to vector<16x1xf32>
    %18 = arith.divf %16, %17 : vector<16x1xf32>
    %19 = arith.mulf %14, %14 : vector<16x32xf32>
    %cst_17 = arith.constant dense<0.000000e+00> : vector<16xf32>
    %20 = vector.multi_reduction <add>, %19, %cst_17 [1] : vector<16x32xf32> to vector<16xf32>
    %21 = vector.shape_cast %20 : vector<16xf32> to vector<16x1xf32>
    %cst_18 = arith.constant 3.200000e+01 : f32
    %22 = vector.broadcast %cst_18 : f32 to vector<16x1xf32>
    %23 = arith.divf %21, %22 : vector<16x1xf32>
    %24 = arith.mulf %18, %18 : vector<16x1xf32>
    %25 = arith.subf %23, %24 : vector<16x1xf32>
    %26 = vector.broadcast %18 : vector<16x1xf32> to vector<16x32xf32>
    %27 = arith.subf %14, %26 : vector<16x32xf32>
    %cst_19 = arith.constant 9.99999974E-6 : f32
    %28 = vector.broadcast %cst_19 : f32 to vector<16x1xf32>
    %29 = arith.addf %25, %28 : vector<16x1xf32>
    %30 = math.rsqrt %29 : vector<16x1xf32>
    %31 = vector.broadcast %30 : vector<16x1xf32> to vector<16x32xf32>
    %32 = arith.mulf %27, %31 : vector<16x32xf32>
    %c0_20 = arith.constant 0 : index
    %c0_21 = arith.constant 0 : index
    %33 = vector.load %arg10[%c0_20, %c0_21] : memref<1x32xf32, #tpu.memory_space<vmem>>, vector<1x32xf32>
    %34 = vector.broadcast %33 : vector<1x32xf32> to vector<16x32xf32>
    %35 = arith.mulf %32, %34 : vector<16x32xf32>
    %c0_22 = arith.constant 0 : index
    %c0_23 = arith.constant 0 : index
    %36 = vector.load %arg11[%c0_22, %c0_23] : memref<1x32xf32, #tpu.memory_space<vmem>>, vector<1x32xf32>
    %37 = vector.broadcast %36 : vector<1x32xf32> to vector<16x32xf32>
    %38 = arith.addf %35, %37 : vector<16x32xf32>
    %c0_24 = arith.constant 0 : index
    %c0_25 = arith.constant 0 : index
    %39 = vector.load %arg6[%c0_24, %c0_25] : memref<32x64xf32, #tpu.memory_space<vmem>>, vector<32x64xf32>
    %cst_26 = arith.constant dense<0.000000e+00> : vector<16x64xf32>
    %40 = tpu.matmul %38, %39, %cst_26 {dimension_numbers = #tpu.dot_dimension_numbers<[1], [0], [0], [1], [0, 0, 1, 1], [], []>} : vector<16x32xf32>, vector<32x64xf32>, vector<16x64xf32> -> vector<16x64xf32>
    %c0_27 = arith.constant 0 : index
    %c0_28 = arith.constant 0 : index
    %41 = vector.load %arg7[%c0_27, %c0_28] : memref<1x64xf32, #tpu.memory_space<vmem>>, vector<1x64xf32>
    %42 = vector.broadcast %41 : vector<1x64xf32> to vector<16x64xf32>
    %43 = arith.addf %40, %42 : vector<16x64xf32>
    %cst_29 = arith.constant 0.000000e+00 : f32
    %44 = vector.broadcast %cst_29 : f32 to vector<16x64xf32>
    %45 = arith.maximumf %43, %44 : vector<16x64xf32>
    %c0_30 = arith.constant 0 : index
    %c0_31 = arith.constant 0 : index
    %46 = vector.load %arg8[%c0_30, %c0_31] : memref<64x32xf32, #tpu.memory_space<vmem>>, vector<64x32xf32>
    %cst_32 = arith.constant dense<0.000000e+00> : vector<16x32xf32>
    %47 = tpu.matmul %45, %46, %cst_32 {dimension_numbers = #tpu.dot_dimension_numbers<[1], [0], [0], [1], [0, 0, 1, 1], [], []>} : vector<16x64xf32>, vector<64x32xf32>, vector<16x32xf32> -> vector<16x32xf32>
    %c0_33 = arith.constant 0 : index
    %c0_34 = arith.constant 0 : index
    %48 = vector.load %arg9[%c0_33, %c0_34] : memref<1x32xf32, #tpu.memory_space<vmem>>, vector<1x32xf32>
    %49 = vector.broadcast %48 : vector<1x32xf32> to vector<16x32xf32>
    %50 = arith.addf %47, %49 : vector<16x32xf32>
    %51 = arith.addf %38, %50 : vector<16x32xf32>
    %cst_35 = arith.constant dense<0.000000e+00> : vector<16xf32>
    %52 = vector.multi_reduction <add>, %51, %cst_35 [1] : vector<16x32xf32> to vector<16xf32>
    %53 = vector.shape_cast %52 : vector<16xf32> to vector<16x1xf32>
    %cst_36 = arith.constant 3.200000e+01 : f32
    %54 = vector.broadcast %cst_36 : f32 to vector<16x1xf32>
    %55 = arith.divf %53, %54 : vector<16x1xf32>
    %56 = arith.mulf %51, %51 : vector<16x32xf32>
    %cst_37 = arith.constant dense<0.000000e+00> : vector<16xf32>
    %57 = vector.multi_reduction <add>, %56, %cst_37 [1] : vector<16x32xf32> to vector<16xf32>
    %58 = vector.shape_cast %57 : vector<16xf32> to vector<16x1xf32>
    %cst_38 = arith.constant 3.200000e+01 : f32
    %59 = vector.broadcast %cst_38 : f32 to vector<16x1xf32>
    %60 = arith.divf %58, %59 : vector<16x1xf32>
    %61 = arith.mulf %55, %55 : vector<16x1xf32>
    %62 = arith.subf %60, %61 : vector<16x1xf32>
    %63 = vector.broadcast %55 : vector<16x1xf32> to vector<16x32xf32>
    %64 = arith.subf %51, %63 : vector<16x32xf32>
    %cst_39 = arith.constant 9.99999974E-6 : f32
    %65 = vector.broadcast %cst_39 : f32 to vector<16x1xf32>
    %66 = arith.addf %62, %65 : vector<16x1xf32>
    %67 = math.rsqrt %66 : vector<16x1xf32>
    %68 = vector.broadcast %67 : vector<16x1xf32> to vector<16x32xf32>
    %69 = arith.mulf %64, %68 : vector<16x32xf32>
    %c0_40 = arith.constant 0 : index
    %c0_41 = arith.constant 0 : index
    %70 = vector.load %arg12[%c0_40, %c0_41] : memref<1x32xf32, #tpu.memory_space<vmem>>, vector<1x32xf32>
    %71 = vector.broadcast %70 : vector<1x32xf32> to vector<16x32xf32>
    %72 = arith.mulf %69, %71 : vector<16x32xf32>
    %c0_42 = arith.constant 0 : index
    %c0_43 = arith.constant 0 : index
    %73 = vector.load %arg13[%c0_42, %c0_43] : memref<1x32xf32, #tpu.memory_space<vmem>>, vector<1x32xf32>
    %74 = vector.broadcast %73 : vector<1x32xf32> to vector<16x32xf32>
    %75 = arith.addf %72, %74 : vector<16x32xf32>
    %c0_44 = arith.constant 0 : index
    %c0_45 = arith.constant 0 : index
    %76 = vector.load %arg14[%c0_44, %c0_45] : memref<16x32xf32, #tpu.memory_space<vmem>>, vector<16x32xf32>
    tpu.vector_store %arg14[%c0_44, %c0_45], %75 {strides = array<i32>} : memref<16x32xf32, #tpu.memory_space<vmem>>, vector<16x32xf32>,
    return
  }
  func.func @transform_0(%arg0: i32) -> (i32, i32) {
    %c0_i32 = arith.constant 0 : i32
    %c0_i32_0 = arith.constant 0 : i32
    return %arg0, %c0_i32 : i32, i32
  }
  func.func @transform_1(%arg0: i32) -> (i32, i32) {
    %c0_i32 = arith.constant 0 : i32
    %c0_i32_0 = arith.constant 0 : i32
    %c0_i32_1 = arith.constant 0 : i32
    return %c0_i32, %c0_i32_0 : i32, i32
  }
  func.func @transform_2(%arg0: i32) -> (i32, i32) {
    %c0_i32 = arith.constant 0 : i32
    %c0_i32_0 = arith.constant 0 : i32
    %c0_i32_1 = arith.constant 0 : i32
    return %c0_i32, %c0_i32_0 : i32, i32
  }
  func.func @transform_3(%arg0: i32) -> (i32, i32) {
    %c0_i32 = arith.constant 0 : i32
    %c0_i32_0 = arith.constant 0 : i32
    %c0_i32_1 = arith.constant 0 : i32
    return %c0_i32, %c0_i32_0 : i32, i32
  }
  func.func @transform_4(%arg0: i32) -> (i32, i32) {
    %c0_i32 = arith.constant 0 : i32
    %c0_i32_0 = arith.constant 0 : i32
    %c0_i32_1 = arith.constant 0 : i32
    return %c0_i32, %c0_i32_0 : i32, i32
  }
  func.func @transform_5(%arg0: i32) -> (i32, i32) {
    %c0_i32 = arith.constant 0 : i32
    %c0_i32_0 = arith.constant 0 : i32
    %c0_i32_1 = arith.constant 0 : i32
    return %c0_i32, %c0_i32_0 : i32, i32
  }
  func.func @transform_6(%arg0: i32) -> (i32, i32) {
    %c0_i32 = arith.constant 0 : i32
    %c0_i32_0 = arith.constant 0 : i32
    %c0_i32_1 = arith.constant 0 : i32
    return %c0_i32, %c0_i32_0 : i32, i32
  }
  func.func @transform_7(%arg0: i32) -> (i32, i32) {
    %c0_i32 = arith.constant 0 : i32
    %c0_i32_0 = arith.constant 0 : i32
    %c0_i32_1 = arith.constant 0 : i32
    return %c0_i32, %c0_i32_0 : i32, i32
  }
  func.func @transform_8(%arg0: i32) -> (i32, i32) {
    %c0_i32 = arith.constant 0 : i32
    %c0_i32_0 = arith.constant 0 : i32
    %c0_i32_1 = arith.constant 0 : i32
    return %c0_i32, %c0_i32_0 : i32, i32
  }
  func.func @transform_9(%arg0: i32) -> (i32, i32) {
    %c0_i32 = arith.constant 0 : i32
    %c0_i32_0 = arith.constant 0 : i32
    %c0_i32_1 = arith.constant 0 : i32
    return %c0_i32, %c0_i32_0 : i32, i32
  }
  func.func @transform_10(%arg0: i32) -> (i32, i32) {
    %c0_i32 = arith.constant 0 : i32
    %c0_i32_0 = arith.constant 0 : i32
    %c0_i32_1 = arith.constant 0 : i32
    return %c0_i32, %c0_i32_0 : i32, i32
  }
  func.func @transform_11(%arg0: i32) -> (i32, i32) {
    %c0_i32 = arith.constant 0 : i32
    %c0_i32_0 = arith.constant 0 : i32
    %c0_i32_1 = arith.constant 0 : i32
    return %c0_i32, %c0_i32_0 : i32, i32
  }
  func.func @transform_12(%arg0: i32) -> (i32, i32) {
    %c0_i32 = arith.constant 0 : i32
    %c0_i32_0 = arith.constant 0 : i32
    %c0_i32_1 = arith.constant 0 : i32
    return %c0_i32, %c0_i32_0 : i32, i32
  }
  func.func @transform_13(%arg0: i32) -> (i32, i32) {
    %c0_i32 = arith.constant 0 : i32
    %c0_i32_0 = arith.constant 0 : i32
    return %arg0, %c0_i32 : i32, i32
  }
  func.func @transform_14(%arg0: i32) -> (i32, i32, i32) {
    %c0_i32 = arith.constant 0 : i32
    %c0_i32_0 = arith.constant 0 : i32
    %c0_i32_1 = arith.constant 0 : i32
    return %arg0, %c0_i32, %c0_i32_0 : i32, i32, i32
  }
}

</mosaic_0001>

<llo_original>
// kernel: tpu_custom_call.1
$region0: #{tpu_custom_call.1}
  #allocation0 [shape = 'u32[]', space=smem, size = 0x4, offset = 0x4, fixed_abs, tag = 'smem constant byte address 0x4 - core index']
  #allocation1 [shape = 'u32[144,128]{1,0:T(1,128)}', space=vmem, size = 0x12000, scoped, tag = 'internal scratch']
  #allocation2 [shape = 'f32[16,96]{1,0:T(8,128)}', space=vmem, size = 0x2000, scoped, tag = 'scratch operand']
  #allocation3 [shape = 'f32[16,32]{1,0:T(8,128)}', space=vmem, size = 0x2000, scoped, tag = 'scratch operand']
  %s0 = inlined_call_operand.vmem [shape: f32[32,32], index: 0, kind: input, shape index: {}]
  %s1 = inlined_call_operand.vmem [shape: f32[32,96], index: 1, kind: input, shape index: {}]
  %s2 = inlined_call_operand.vmem [shape: f32[1,96], index: 2, kind: input, shape index: {}]
  %s3 = inlined_call_operand.vmem [shape: f32[32,32], index: 3, kind: input, shape index: {}]
  %s4 = inlined_call_operand.vmem [shape: f32[1,32], index: 4, kind: input, shape index: {}]
  %s5 = inlined_call_operand.hbm [shape: f32[32,64], index: 5, kind: input, shape index: {}]
  %s6 = inlined_call_operand.vmem [shape: f32[1,64], index: 6, kind: input, shape index: {}]
  %s7 = inlined_call_operand.vmem [shape: f32[64,32], index: 7, kind: input, shape index: {}]
  %s8 = inlined_call_operand.vmem [shape: f32[1,32], index: 8, kind: input, shape index: {}]
  %s9 = inlined_call_operand.vmem [shape: f32[1,32], index: 9, kind: input, shape index: {}]
  %s10 = inlined_call_operand.vmem [shape: f32[1,32], index: 10, kind: input, shape index: {}]
  %s11 = inlined_call_operand.vmem [shape: f32[1,32], index: 11, kind: input, shape index: {}]
  %s12 = inlined_call_operand.vmem [shape: f32[1,32], index: 12, kind: input, shape index: {}]
  %s13 = inlined_call_operand.hbm [shape: f32[32,32], index: 13, kind: output, shape index: {0}]
  %s14 = inlined_call_operand.hbm [shape: f32[4,8,8], index: 14, kind: output, shape index: {1}]
  %15 = xla_tuple %s13, %s14
  %s16 = sld [smem:[#allocation0]]
  $region104: #{tpu_custom_call.1} parent=0
    _
  %s18 = ssub.s32 1, %s16
  %s19 = scalar_select 0, %s18, %s16
  $region1: #{tpu_custom_call.1} parent=0
    #allocation4 [shape = 'u8[16384]{0}', space=vmem, size = 0x4000, scoped, tag = 'input window, operand 5, single buffered']
    #allocation5 [shape = 's32[2]{0}', space=sflag, size = 0x8, scoped, tag = 'scoped memory for tpu_custom_call.1']
    #allocation6 [shape = 's32[2]{0}', space=sflag, size = 0x8, scoped, tag = 'scoped memory for tpu_custom_call.1']
    #allocation7 [shape = 'u8[16384]{0}', space=vmem, size = 0x4000, scoped, tag = 'output window, operand 0']
    #allocation8 [shape = 'u8[16384]{0}', space=vmem, size = 0x4000, scoped, tag = 'output window, operand 1']
    #allocation9 [shape = 's32[2]{0}', space=sflag, size = 0x8, scoped, tag = 'scoped memory for tpu_custom_call.1']
    %20 = vsyncpa [#allocation5], 0
    %21 = vsyncpa [#allocation6], 0
    %s22 = scalar_lea.sflag [#allocation6], 1
    %23 = vsyncpa %s22, 0
    %24 = vsyncpa [#allocation9], 0
    %s25 = scalar_lea.sflag [#allocation9], 1
    %26 = vsyncpa %s25, 0
    loop: start=0, step=1, limit=4
    $region2: #{tpu_custom_call.1} parent=1 // loop_pre_header
      _
    $region3: #{tpu_custom_call.1} parent=1 // loop_header
      %s28 = sphi 0, %s32
      %p29 = scmp.ge.s32.totalorder %s28, 4
      %s38 = sphi 0, %s40
      %s41 = sphi 0, %s38
      %s42 = sphi 0, %s41
      %s58 = sphi 0, %s42
      %s62 = sphi 0, %s62
      %s64 = sphi 0, %s62
      %s65 = sphi 0, %s64
      %s79 = sphi 0, %s65
      %s83 = sphi 0, %s83
      %s85 = sphi 0, %s83
      %s86 = sphi 0, %s85
      %s100 = sphi 0, %s86
      %s104 = sphi 0, %s104
      %s106 = sphi 0, %s104
      %s107 = sphi 0, %s106
      %s121 = sphi 0, %s107
      %s125 = sphi 0, %s125
      %s127 = sphi 0, %s125
      %s128 = sphi 0, %s127
      %s142 = sphi 0, %s128
      %s146 = sphi 0, %s146
      %s148 = sphi 0, %s146
      %s149 = sphi 0, %s148
      %s163 = sphi 0, %s149
      %s167 = sphi 0, %s167
      %s169 = sphi 0, %s167
      %s170 = sphi 0, %s169
      %s184 = sphi 0, %s170
      %s188 = sphi 0, %s188
      %s190 = sphi 0, %s188
      %s191 = sphi 0, %s190
      %s205 = sphi 0, %s191
      %s209 = sphi 0, %s209
      %s211 = sphi 0, %s209
      %s212 = sphi 0, %s211
      %s226 = sphi 0, %s212
      %s230 = sphi 0, %s230
      %s232 = sphi 0, %s230
      %s233 = sphi 0, %s232
      %s247 = sphi 0, %s233
      %s251 = sphi 0, %s251
      %s253 = sphi 0, %s251
      %s254 = sphi 0, %s253
      %s268 = sphi 0, %s254
      %s272 = sphi 0, %s272
      %s274 = sphi 0, %s272
      %s275 = sphi 0, %s274
      %s289 = sphi 0, %s275
      %s293 = sphi 0, %s293
      %s295 = sphi 0, %s293
      %s296 = sphi 0, %s295
      %s310 = sphi 0, %s296
      %s316 = sphi 0, %s318
      %s319 = sphi 0, %s316
      %s320 = sphi 0, %s319
      %s336 = sphi 0, %s320
      %s342 = sphi 0, %s344
      %s345 = sphi 0, %s342
      %s346 = sphi 0, %s345
      %s362 = sphi 0, %s346
    $region4: #{tpu_custom_call.1} parent=1 // loop_header_branch
      %31 = sbr.rel (%p29) target = $region8
    $region5: #{tpu_custom_call.1} parent=1 // loop_body
      %s33 = ssub.s32 %s28, 1
      %s34 = ssub.s32 %s28, 2
      %s35 = sadd.s32 %s28, 1
      %s36 = ssub.s32 %s28, %s35
      %p37 = scmp.eq.s32.totalorder %s36, 0
      %s39 = sadd.s32 %s38, 1
      %s40 = scalar_select %p37, %s38, %s39
      %p43 = pneg %p37
      %p44 = scmp.eq.s32.totalorder %s28, 1
      %p45 = por %p43, %p44
      %p46 = scmp.ne.s32.totalorder %s38, %s41
      %p47 = scmp.eq.s32.totalorder %s28, 0
      %p48 = por %p46, %p47
      %p49 = scmp.ne.s32.totalorder %s38, %s41
      %p50 = scmp.eq.s32.totalorder %s33, 1
      %p51 = por %p49, %p50
      %p52 = scmp.ne.s32.totalorder %s41, %s42
      %p53 = scmp.eq.s32.totalorder %s33, 0
      %p54 = por %p52, %p53
      %p55 = scmp.ne.s32.totalorder %s41, %s42
      %p56 = scmp.eq.s32.totalorder %s34, 1
      %p57 = por %p55, %p56
      %p59 = scmp.ne.s32.totalorder %s42, %s58
      %p60 = scmp.eq.s32.totalorder %s34, 0
      %p61 = por %p59, %p60
      %s63 = sadd.s32 %s62, 1
      %p66 = scmp.eq.s32.totalorder %s28, 1
      %p67 = scmp.ne.s32.totalorder %s62, %s64
      %p68 = scmp.eq.s32.totalorder %s28, 0
      %p69 = por %p67, %p68
      %p70 = scmp.ne.s32.totalorder %s62, %s64
      %p71 = scmp.eq.s32.totalorder %s33, 1
      %p72 = por %p70, %p71
      %p73 = scmp.ne.s32.totalorder %s64, %s65
      %p74 = scmp.eq.s32.totalorder %s33, 0
      %p75 = por %p73, %p74
      %p76 = scmp.ne.s32.totalorder %s64, %s65
      %p77 = scmp.eq.s32.totalorder %s34, 1
      %p78 = por %p76, %p77
      %p80 = scmp.ne.s32.totalorder %s65, %s79
      %p81 = scmp.eq.s32.totalorder %s34, 0
      %p82 = por %p80, %p81
      %s84 = sadd.s32 %s83, 1
      %p87 = scmp.eq.s32.totalorder %s28, 1
      %p88 = scmp.ne.s32.totalorder %s83, %s85
      %p89 = scmp.eq.s32.totalorder %s28, 0
      %p90 = por %p88, %p89
      %p91 = scmp.ne.s32.totalorder %s83, %s85
      %p92 = scmp.eq.s32.totalorder %s33, 1
      %p93 = por %p91, %p92
      %p94 = scmp.ne.s32.totalorder %s85, %s86
      %p95 = scmp.eq.s32.totalorder %s33, 0
      %p96 = por %p94, %p95
      %p97 = scmp.ne.s32.totalorder %s85, %s86
      %p98 = scmp.eq.s32.totalorder %s34, 1
      %p99 = por %p97, %p98
      %p101 = scmp.ne.s32.totalorder %s86, %s100
      %p102 = scmp.eq.s32.totalorder %s34, 0
      %p103 = por %p101, %p102
      %s105 = sadd.s32 %s104, 1
      %p108 = scmp.eq.s32.totalorder %s28, 1
      %p109 = scmp.ne.s32.totalorder %s104, %s106
      %p110 = scmp.eq.s32.totalorder %s28, 0
      %p111 = por %p109, %p110
      %p112 = scmp.ne.s32.totalorder %s104, %s106
      %p113 = scmp.eq.s32.totalorder %s33, 1
      %p114 = por %p112, %p113
      %p115 = scmp.ne.s32.totalorder %s106, %s107
      %p116 = scmp.eq.s32.totalorder %s33, 0
      %p117 = por %p115, %p116
      %p118 = scmp.ne.s32.totalorder %s106, %s107
      %p119 = scmp.eq.s32.totalorder %s34, 1
      %p120 = por %p118, %p119
      %p122 = scmp.ne.s32.totalorder %s107, %s121
      %p123 = scmp.eq.s32.totalorder %s34, 0
      %p124 = por %p122, %p123
      %s126 = sadd.s32 %s125, 1
      %p129 = scmp.eq.s32.totalorder %s28, 1
      %p130 = scmp.ne.s32.totalorder %s125, %s127
      %p131 = scmp.eq.s32.totalorder %s28, 0
      %p132 = por %p130, %p131
      %p133 = scmp.ne.s32.totalorder %s125, %s127
      %p134 = scmp.eq.s32.totalorder %s33, 1
      %p135 = por %p133, %p134
      %p136 = scmp.ne.s32.totalorder %s127, %s128
      %p137 = scmp.eq.s32.totalorder %s33, 0
      %p138 = por %p136, %p137
      %p139 = scmp.ne.s32.totalorder %s127, %s128
      %p140 = scmp.eq.s32.totalorder %s34, 1
      %p141 = por %p139, %p140
      %p143 = scmp.ne.s32.totalorder %s128, %s142
      %p144 = scmp.eq.s32.totalorder %s34, 0
      %p145 = por %p143, %p144
      %s147 = sadd.s32 %s146, 1
      %p150 = scmp.eq.s32.totalorder %s28, 1
      %p151 = scmp.ne.s32.totalorder %s146, %s148
      %p152 = scmp.eq.s32.totalorder %s28, 0
      %p153 = por %p151, %p152
      %p154 = scmp.ne.s32.totalorder %s146, %s148
      %p155 = scmp.eq.s32.totalorder %s33, 1
      %p156 = por %p154, %p155
      %p157 = scmp.ne.s32.totalorder %s148, %s149
      %p158 = scmp.eq.s32.totalorder %s33, 0
      %p159 = por %p157, %p158
      %p160 = scmp.ne.s32.totalorder %s148, %s149
      %p161 = scmp.eq.s32.totalorder %s34, 1
      %p162 = por %p160, %p161
      %p164 = scmp.ne.s32.totalorder %s149, %s163
      %p165 = scmp.eq.s32.totalorder %s34, 0
      %p166 = por %p164, %p165
      %s168 = sadd.s32 %s167, 1
      %p171 = scmp.eq.s32.totalorder %s28, 1
      %p172 = scmp.ne.s32.totalorder %s167, %s169
      %p173 = scmp.eq.s32.totalorder %s28, 0
      %p174 = por %p172, %p173
      %p175 = scmp.ne.s32.totalorder %s167, %s169
      %p176 = scmp.eq.s32.totalorder %s33, 1
      %p177 = por %p175, %p176
      %p178 = scmp.ne.s32.totalorder %s169, %s170
      %p179 = scmp.eq.s32.totalorder %s33, 0
      %p180 = por %p178, %p179
      %p181 = scmp.ne.s32.totalorder %s169, %s170
      %p182 = scmp.eq.s32.totalorder %s34, 1
      %p183 = por %p181, %p182
      %p185 = scmp.ne.s32.totalorder %s170, %s184
      %p186 = scmp.eq.s32.totalorder %s34, 0
      %p187 = por %p185, %p186
      %s189 = sadd.s32 %s188, 1
      %p192 = scmp.eq.s32.totalorder %s28, 1
      %p193 = scmp.ne.s32.totalorder %s188, %s190
      %p194 = scmp.eq.s32.totalorder %s28, 0
      %p195 = por %p193, %p194
      %p196 = scmp.ne.s32.totalorder %s188, %s190
      %p197 = scmp.eq.s32.totalorder %s33, 1
      %p198 = por %p196, %p197
      %p199 = scmp.ne.s32.totalorder %s190, %s191
      %p200 = scmp.eq.s32.totalorder %s33, 0
      %p201 = por %p199, %p200
      %p202 = scmp.ne.s32.totalorder %s190, %s191
      %p203 = scmp.eq.s32.totalorder %s34, 1
      %p204 = por %p202, %p203
      %p206 = scmp.ne.s32.totalorder %s191, %s205
      %p207 = scmp.eq.s32.totalorder %s34, 0
      %p208 = por %p206, %p207
      %s210 = sadd.s32 %s209, 1
      %p213 = scmp.eq.s32.totalorder %s28, 1
      %p214 = scmp.ne.s32.totalorder %s209, %s211
      %p215 = scmp.eq.s32.totalorder %s28, 0
      %p216 = por %p214, %p215
      %p217 = scmp.ne.s32.totalorder %s209, %s211
      %p218 = scmp.eq.s32.totalorder %s33, 1
      %p219 = por %p217, %p218
      %p220 = scmp.ne.s32.totalorder %s211, %s212
      %p221 = scmp.eq.s32.totalorder %s33, 0
      %p222 = por %p220, %p221
      %p223 = scmp.ne.s32.totalorder %s211, %s212
      %p224 = scmp.eq.s32.totalorder %s34, 1
      %p225 = por %p223, %p224
      %p227 = scmp.ne.s32.totalorder %s212, %s226
      %p228 = scmp.eq.s32.totalorder %s34, 0
      %p229 = por %p227, %p228
      %s231 = sadd.s32 %s230, 1
      %p234 = scmp.eq.s32.totalorder %s28, 1
      %p235 = scmp.ne.s32.totalorder %s230, %s232
      %p236 = scmp.eq.s32.totalorder %s28, 0
      %p237 = por %p235, %p236
      %p238 = scmp.ne.s32.totalorder %s230, %s232
      %p239 = scmp.eq.s32.totalorder %s33, 1
      %p240 = por %p238, %p239
      %p241 = scmp.ne.s32.totalorder %s232, %s233
      %p242 = scmp.eq.s32.totalorder %s33, 0
      %p243 = por %p241, %p242
      %p244 = scmp.ne.s32.totalorder %s232, %s233
      %p245 = scmp.eq.s32.totalorder %s34, 1
      %p246 = por %p244, %p245
      %p248 = scmp.ne.s32.totalorder %s233, %s247
      %p249 = scmp.eq.s32.totalorder %s34, 0
      %p250 = por %p248, %p249
      %s252 = sadd.s32 %s251, 1
      %p255 = scmp.eq.s32.totalorder %s28, 1
      %p256 = scmp.ne.s32.totalorder %s251, %s253
      %p257 = scmp.eq.s32.totalorder %s28, 0
      %p258 = por %p256, %p257
      %p259 = scmp.ne.s32.totalorder %s251, %s253
      %p260 = scmp.eq.s32.totalorder %s33, 1
      %p261 = por %p259, %p260
      %p262 = scmp.ne.s32.totalorder %s253, %s254
      %p263 = scmp.eq.s32.totalorder %s33, 0
      %p264 = por %p262, %p263
      %p265 = scmp.ne.s32.totalorder %s253, %s254
      %p266 = scmp.eq.s32.totalorder %s34, 1
      %p267 = por %p265, %p266
      %p269 = scmp.ne.s32.totalorder %s254, %s268
      %p270 = scmp.eq.s32.totalorder %s34, 0
      %p271 = por %p269, %p270
      %s273 = sadd.s32 %s272, 1
      %p276 = scmp.eq.s32.totalorder %s28, 1
      %p277 = scmp.ne.s32.totalorder %s272, %s274
      %p278 = scmp.eq.s32.totalorder %s28, 0
      %p279 = por %p277, %p278
      %p280 = scmp.ne.s32.totalorder %s272, %s274
      %p281 = scmp.eq.s32.totalorder %s33, 1
      %p282 = por %p280, %p281
      %p283 = scmp.ne.s32.totalorder %s274, %s275
      %p284 = scmp.eq.s32.totalorder %s33, 0
      %p285 = por %p283, %p284
      %p286 = scmp.ne.s32.totalorder %s274, %s275
      %p287 = scmp.eq.s32.totalorder %s34, 1
      %p288 = por %p286, %p287
      %p290 = scmp.ne.s32.totalorder %s275, %s289
      %p291 = scmp.eq.s32.totalorder %s34, 0
      %p292 = por %p290, %p291
      %s294 = sadd.s32 %s293, 1
      %p297 = scmp.eq.s32.totalorder %s28, 1
      %p298 = scmp.ne.s32.totalorder %s293, %s295
      %p299 = scmp.eq.s32.totalorder %s28, 0
      %p300 = por %p298, %p299
      %p301 = scmp.ne.s32.totalorder %s293, %s295
      %p302 = scmp.eq.s32.totalorder %s33, 1
      %p303 = por %p301, %p302
      %p304 = scmp.ne.s32.totalorder %s295, %s296
      %p305 = scmp.eq.s32.totalorder %s33, 0
      %p306 = por %p304, %p305
      %p307 = scmp.ne.s32.totalorder %s295, %s296
      %p308 = scmp.eq.s32.totalorder %s34, 1
      %p309 = por %p307, %p308
      %p311 = scmp.ne.s32.totalorder %s296, %s310
      %p312 = scmp.eq.s32.totalorder %s34, 0
      %p313 = por %p311, %p312
      %s314 = ssub.s32 %s28, %s35
      %p315 = scmp.eq.s32.totalorder %s314, 0
      %s317 = sadd.s32 %s316, 1
      %s318 = scalar_select %p315, %s316, %s317
      %p321 = pneg %p315
      %p322 = scmp.eq.s32.totalorder %s28, 1
      %p323 = por %p321, %p322
      %p324 = scmp.ne.s32.totalorder %s316, %s319
      %p325 = scmp.eq.s32.totalorder %s28, 0
      %p326 = por %p324, %p325
      %p327 = scmp.ne.s32.totalorder %s316, %s319
      %p328 = scmp.eq.s32.totalorder %s33, 1
      %p329 = por %p327, %p328
      %p330 = scmp.ne.s32.totalorder %s319, %s320
      %p331 = scmp.eq.s32.totalorder %s33, 0
      %p332 = por %p330, %p331
      %p333 = scmp.ne.s32.totalorder %s319, %s320
      %p334 = scmp.eq.s32.totalorder %s34, 1
      %p335 = por %p333, %p334
      %p337 = scmp.ne.s32.totalorder %s320, %s336
      %p338 = scmp.eq.s32.totalorder %s34, 0
      %p339 = por %p337, %p338
      %s340 = ssub.s32 %s28, %s35
      %p341 = scmp.eq.s32.totalorder %s340, 0
      %s343 = sadd.s32 %s342, 1
      %s344 = scalar_select %p341, %s342, %s343
      %p347 = pneg %p341
      %p348 = scmp.eq.s32.totalorder %s28, 1
      %p349 = por %p347, %p348
      %p350 = scmp.ne.s32.totalorder %s342, %s345
      %p351 = scmp.eq.s32.totalorder %s28, 0
      %p352 = por %p350, %p351
      %p353 = scmp.ne.s32.totalorder %s342, %s345
      %p354 = scmp.eq.s32.totalorder %s33, 1
      %p355 = por %p353, %p354
      %p356 = scmp.ne.s32.totalorder %s345, %s346
      %p357 = scmp.eq.s32.totalorder %s33, 0
      %p358 = por %p356, %p357
      %p359 = scmp.ne.s32.totalorder %s345, %s346
      %p360 = scmp.eq.s32.totalorder %s34, 1
      %p361 = por %p359, %p360
      %p363 = scmp.ne.s32.totalorder %s346, %s362
      %p364 = scmp.eq.s32.totalorder %s34, 0
      %p365 = por %p363, %p364
      %p366 = scmp.le.s32.totalorder 1, %s28
      %p367 = scmp.lt.s32.totalorder %s28, 3
      %p368 = pnand %p366, %p367
      %p369 = pneg %p368
      // Predicated region
      $region9: #{tpu_custom_call.1} parent=5 // pred_check
        _
      $region10: #{tpu_custom_call.1} parent=5 // pred_check_branch
        %371 = sbr.rel (%p368) target = $region12
      $region11: #{tpu_custom_call.1} parent=5 // pred_region
        %s372 = ssub.s32 %s28, 1
        // Predicated region
        $region13: #{tpu_custom_call.1} parent=11 // pred_check
          %p373 = pneg %p75
        $region14: #{tpu_custom_call.1} parent=11 // pred_check_branch
          %375 = sbr.rel (%p373) target = $region16
        $region15: #{tpu_custom_call.1} parent=11 // pred_region
          _
        $region16: #{tpu_custom_call.1} parent=11 // pred_fallthru
          _
        // Predicated region
        $region17: #{tpu_custom_call.1} parent=11 // pred_check
          %p376 = pneg %p96
        $region18: #{tpu_custom_call.1} parent=11 // pred_check_branch
          %378 = sbr.rel (%p376) target = $region20
        $region19: #{tpu_custom_call.1} parent=11 // pred_region
          _
        $region20: #{tpu_custom_call.1} parent=11 // pred_fallthru
          _
        // Predicated region
        $region21: #{tpu_custom_call.1} parent=11 // pred_check
          %p379 = pneg %p117
        $region22: #{tpu_custom_call.1} parent=11 // pred_check_branch
          %381 = sbr.rel (%p379) target = $region24
        $region23: #{tpu_custom_call.1} parent=11 // pred_region
          _
        $region24: #{tpu_custom_call.1} parent=11 // pred_fallthru
          _
        // Predicated region
        $region25: #{tpu_custom_call.1} parent=11 // pred_check
          %p382 = pneg %p138
        $region26: #{tpu_custom_call.1} parent=11 // pred_check_branch
          %384 = sbr.rel (%p382) target = $region28
        $region27: #{tpu_custom_call.1} parent=11 // pred_region
          _
        $region28: #{tpu_custom_call.1} parent=11 // pred_fallthru
          _
        // Predicated region
        $region29: #{tpu_custom_call.1} parent=11 // pred_check
          %p385 = pneg %p159
        $region30: #{tpu_custom_call.1} parent=11 // pred_check_branch
          %387 = sbr.rel (%p385) target = $region32
        $region31: #{tpu_custom_call.1} parent=11 // pred_region
          %s389 = ssub.s32 512, 512
          %390 = vsyncadd [#allocation5], %s389
          %s391 = sshll.u32 [#allocation4], 4
          %s392 = int_to_ptr.vmem [resolvable:$true] %s391
          %397 = dma.hbm_to_vmem [thread:$0]  %s5, 512, %s392, [#allocation5], 128, 128, 8
        $region32: #{tpu_custom_call.1} parent=11 // pred_fallthru
          _
        // Predicated region
        $region33: #{tpu_custom_call.1} parent=11 // pred_check
          %p398 = pneg %p180
        $region34: #{tpu_custom_call.1} parent=11 // pred_check_branch
          %400 = sbr.rel (%p398) target = $region36
        $region35: #{tpu_custom_call.1} parent=11 // pred_region
          _
        $region36: #{tpu_custom_call.1} parent=11 // pred_fallthru
          _
        // Predicated region
        $region37: #{tpu_custom_call.1} parent=11 // pred_check
          %p401 = pneg %p201
        $region38: #{tpu_custom_call.1} parent=11 // pred_check_branch
          %403 = sbr.rel (%p401) target = $region40
        $region39: #{tpu_custom_call.1} parent=11 // pred_region
          _
        $region40: #{tpu_custom_call.1} parent=11 // pred_fallthru
          _
        // Predicated region
        $region41: #{tpu_custom_call.1} parent=11 // pred_check
          %p404 = pneg %p222
        $region42: #{tpu_custom_call.1} parent=11 // pred_check_branch
          %406 = sbr.rel (%p404) target = $region44
        $region43: #{tpu_custom_call.1} parent=11 // pred_region
          _
        $region44: #{tpu_custom_call.1} parent=11 // pred_fallthru
          _
        // Predicated region
        $region45: #{tpu_custom_call.1} parent=11 // pred_check
          %p407 = pneg %p243
        $region46: #{tpu_custom_call.1} parent=11 // pred_check_branch
          %409 = sbr.rel (%p407) target = $region48
        $region47: #{tpu_custom_call.1} parent=11 // pred_region
          _
        $region48: #{tpu_custom_call.1} parent=11 // pred_fallthru
          _
        // Predicated region
        $region49: #{tpu_custom_call.1} parent=11 // pred_check
          %p410 = pneg %p264
        $region50: #{tpu_custom_call.1} parent=11 // pred_check_branch
          %412 = sbr.rel (%p410) target = $region52
        $region51: #{tpu_custom_call.1} parent=11 // pred_region
          _
        $region52: #{tpu_custom_call.1} parent=11 // pred_fallthru
          _
        // Predicated region
        $region53: #{tpu_custom_call.1} parent=11 // pred_check
          %p413 = pneg %p285
        $region54: #{tpu_custom_call.1} parent=11 // pred_check_branch
          %415 = sbr.rel (%p413) target = $region56
        $region55: #{tpu_custom_call.1} parent=11 // pred_region
          _
        $region56: #{tpu_custom_call.1} parent=11 // pred_fallthru
          _
        // Predicated region
        $region57: #{tpu_custom_call.1} parent=11 // pred_check
          %p416 = pneg %p306
        $region58: #{tpu_custom_call.1} parent=11 // pred_check_branch
          %418 = sbr.rel (%p416) target = $region60
        $region59: #{tpu_custom_call.1} parent=11 // pred_region
          _
        $region60: #{tpu_custom_call.1} parent=11 // pred_fallthru
          _
      $region12: #{tpu_custom_call.1} parent=5 // pred_fallthru
        _
      %p419 = scmp.lt.s32.totalorder %s28, 2
      // Predicated region
      $region61: #{tpu_custom_call.1} parent=5 // pred_check
        %p420 = pneg %p419
      $region62: #{tpu_custom_call.1} parent=5 // pred_check_branch
        %422 = sbr.rel (%p420) target = $region64
      $region63: #{tpu_custom_call.1} parent=5 // pred_region
        // Predicated region
        $region65: #{tpu_custom_call.1} parent=63 // pred_check
          %p423 = pneg %p48
        $region66: #{tpu_custom_call.1} parent=63 // pred_check_branch
          %425 = sbr.rel (%p423) target = $region68
        $region67: #{tpu_custom_call.1} parent=63 // pred_region
          %s426 = smul.u32 2, %s28
          %p427 = scmp.lt.s32.totalorder %s426, 3
          %s428 = scalar_select %p427, %s426, 3
          %s429 = smul.addr %s428, 8
          %s430 = scalar_lea.vmem %s0, %s429
          %s431 = smul.u32 2, %s28
        $region68: #{tpu_custom_call.1} parent=63 // pred_fallthru
          _
      $region64: #{tpu_custom_call.1} parent=5 // pred_fallthru
        _
      %p432 = scmp.le.s32.totalorder 1, %s28
      %p433 = scmp.lt.s32.totalorder %s28, 3
      %p434 = pnand %p432, %p433
      %p435 = pneg %p434
      // Predicated region
      $region69: #{tpu_custom_call.1} parent=5 // pred_check
        _
      $region70: #{tpu_custom_call.1} parent=5 // pred_check_branch
        %437 = sbr.rel (%p434) target = $region72
      $region71: #{tpu_custom_call.1} parent=5 // pred_region
        %s438 = ssub.s32 %s28, 1
        // Predicated region
        $region73: #{tpu_custom_call.1} parent=71 // pred_check
          %p439 = pneg %p159
        $region74: #{tpu_custom_call.1} parent=71 // pred_check_branch
          %441 = sbr.rel (%p439) target = $region76
        $region75: #{tpu_custom_call.1} parent=71 // pred_region
          %442 = dma.done [#allocation5], 512
        $region76: #{tpu_custom_call.1} parent=71 // pred_fallthru
          _
        %s443 = smul.u32 2, %s33
        %p444 = scmp.lt.s32.totalorder %s443, 3
        %s445 = scalar_select %p444, %s443, 3
        %s446 = smul.addr %s445, 8
        %s447 = scalar_lea.vmem %s0, %s446
        %p448 = pneg %p54
        %p449 = pneg %p51
        %p450 = pneg %p75
        %p451 = pneg %p72
        %p452 = pneg %p96
        %p453 = pneg %p93
        %p454 = pneg %p117
        %p455 = pneg %p114
        %p456 = pneg %p138
        %p457 = pneg %p135
        %p458 = pneg %p159
        %p459 = pneg %p156
        %p460 = pneg %p180
        %p461 = pneg %p177
        %p462 = pneg %p201
        %p463 = pneg %p198
        %p464 = pneg %p222
        %p465 = pneg %p219
        %p466 = pneg %p243
        %p467 = pneg %p240
        %p468 = pneg %p264
        %p469 = pneg %p261
        %p470 = pneg %p285
        %p471 = pneg %p282
        %p472 = pneg %p306
        %p473 = pneg %p303
        %p474 = pneg %p332
        %p475 = pneg %p329
        %s476 = sand.u32 %s319, 1
        %s477 = scalar_lea.sflag [#allocation6], %s476
        %s478 = sand.u32 %s319, 1
        %s479 = smul.addr %s478, 16
        %s480 = scalar_lea.vmem [#allocation7], %s479
        %p481 = pneg %p358
        %p482 = pneg %p355
        %s483 = sand.u32 %s345, 1
        %s484 = scalar_lea.sflag [#allocation9], %s483
        %s485 = sand.u32 %s345, 1
        %s486 = smul.addr %s485, 16
        %s487 = scalar_lea.vmem [#allocation8], %s486
        %s488 = smul.u32 2, %s33
        %p489 = scmp.lt.s32.totalorder %s488, 3
        %s490 = scalar_select %p489, %s488, 3
        %s491 = smul.addr %s490, 8
        %s492 = scalar_lea.vmem %s0, %s491
        %s493 = smul.u32 2, %s33
        %s494 = smul.u32 2, %s33
        %s495 = smul.u32 2, %s33
        %v496 = vld [vmem:[%s492] sm:$0xff]
        %v497 = vld [vmem:[%s492 + $0x8] sm:$0xff]
        %v498 = vld [vmem:[%s1] sm:$0xff]
        %v499 = vld [vmem:[%s1 + $0x8] sm:$0xff]
        %v500 = vld [vmem:[%s1 + $0x10] sm:$0xff]
        %v501 = vld [vmem:[%s1 + $0x18] sm:$0xff]
        %v502 = vld [vmem:[%s2] sm:$0x1]
        %v504 = vlaneseq
        %v505 = vshrl.u32 %v504, 7
        %v506 = vsub.s32 0, %v505
        %v507 = vrot.slane %v502, %v506
        %vm509 = vcmask 261120
        %v511 = vsel %vm509, %v496, 0
        %v514 = vsel %vm509, %v497, 0
        %516 = vmatprep.subr.mxu0 0.0
        %517 = vmatpush1.msra.mxu0 0.0
        %518 = vmatprep.subr.mxu0 0.0
        %519 = vmatpush1.msra.mxu0 0.0
        %520 = vmatprep.subr.mxu0 0.0
        %521 = vmatpush1.msra.mxu0 0.0
        %522 = vmatprep.subr.mxu0 0.0
        %523 = vmatpush1.msra.mxu0 0.0
        %524 = vmatprep.subr.mxu0 0.0
        %525 = vmatpush1.msra.mxu0 0.0
        %526 = vmatprep.subr.mxu0 0.0
        %527 = vmatpush1.msra.mxu0 0.0
        %528 = vmatprep.subr.mxu0 0.0
        %529 = vmatpush1.msra.mxu0 0.0
        %530 = vmatprep.subr.mxu0 0.0
        %531 = vmatpush1.msra.mxu0 0.0
        %532 = vmatprep.subr.mxu0 0.0
        %533 = vmatpush1.msra.mxu0 0.0
        %534 = vmatprep.subr.mxu0 0.0
        %535 = vmatpush1.msra.mxu0 0.0
        %536 = vmatprep.subr.mxu0 0.0
        %537 = vmatpush1.msra.mxu0 0.0
        %538 = vmatprep.subr.mxu0 0.0
        %539 = vmatpush1.msra.mxu0 0.0
        %540 = vmatprep.subr.mxu0 0.0
        %541 = vmatpush1.msra.mxu0 %v501
        %542 = vmatprep.subr.mxu0 0.0
        %543 = vmatpush1.msra.mxu0 %v500
        %544 = vmatprep.subr.mxu0 0.0
        %545 = vmatpush1.msra.mxu0 %v499
        %546 = vmatprep.subr.mxu0 0.0
        %547 = vmatpush1.msra.mxu0 %v498
        %548 = vmatprep.subr.mxu0 0.0
        %549 = vmatpush2.msra.mxu0 0.0
        %550 = vmatprep.subr.mxu0 0.0
        %551 = vmatpush2.msra.mxu0 0.0
        %552 = vmatprep.subr.mxu0 0.0
        %553 = vmatpush2.msra.mxu0 0.0
        %554 = vmatprep.subr.mxu0 0.0
        %555 = vmatpush2.msra.mxu0 0.0
        %556 = vmatprep.subr.mxu0 0.0
        %557 = vmatpush2.msra.mxu0 0.0
        %558 = vmatprep.subr.mxu0 0.0
        %559 = vmatpush2.msra.mxu0 0.0
        %560 = vmatprep.subr.mxu0 0.0
        %561 = vmatpush2.msra.mxu0 0.0
        %562 = vmatprep.subr.mxu0 0.0
        %563 = vmatpush2.msra.mxu0 0.0
        %564 = vmatprep.subr.mxu0 0.0
        %565 = vmatpush2.msra.mxu0 0.0
        %566 = vmatprep.subr.mxu0 0.0
        %567 = vmatpush2.msra.mxu0 0.0
        %568 = vmatprep.subr.mxu0 0.0
        %569 = vmatpush2.msra.mxu0 0.0
        %570 = vmatprep.subr.mxu0 0.0
        %571 = vmatpush2.msra.mxu0 0.0
        %572 = vmatprep.subr.mxu0 0.0
        %573 = vmatpush2.msra.mxu0 0.0
        %574 = vmatprep.subr.mxu0 0.0
        %575 = vmatpush2.msra.mxu0 0.0
        %576 = vmatprep.subr.mxu0 0.0
        %577 = vmatpush2.msra.mxu0 0.0
        %578 = vmatprep.subr.mxu0 0.0
        %579 = vmatpush2.msra.mxu0 0.0
        %580 = vmatprep.mubr.f32.mxu0 0.0
        %581 = vmatmul.mubr.f32.gmra.mxu0 %v511
        %v582 = vpop.f32.mrf.mxu0
        %v583 = vadd.f32 %v507, %v582
        %v584 = vpop.f32.mrf.mxu0
        %585 = vmatprep.mubr.f32.mxu0 0.0
        %586 = vmatmul.mubr.f32.gmra.mxu0 %v514
        %v587 = vpop.f32.mrf.mxu0
        %v588 = vadd.f32 %v507, %v587
        %v589 = vpop.f32.mrf.mxu0
        %590 = vdwg.mxu0
        %vm591 = vcmask 785408
        %592 = vst.msk [vmem:[#allocation2] sm:$0xff] %vm591, %v583
        %593 = vst.msk [vmem:[#allocation2 + $0x8] sm:$0xff] %vm591, %v588
        loop: start=0, step=1, limit=2
        $region77: #{tpu_custom_call.1} parent=71 // loop_pre_header
          _
        $region78: #{tpu_custom_call.1} parent=71 // loop_header
          %s595 = sphi 0, %s599
          %p596 = scmp.ge.s32.totalorder %s595, 2
        $region79: #{tpu_custom_call.1} parent=71 // loop_header_branch
          %598 = sbr.rel (%p596) target = $region83
        $region80: #{tpu_custom_call.1} parent=71 // loop_body
          %s600 = smul.u32 %s595, 8
          %s601 = scalar_lea.vmem [#allocation2], %s600
          %v602 = vld [vmem:[%s601] sm:$0xff]
          %604 = vrot.lane.b32.xlu0 %v602, 96
          %v605 = vpop.permute.xlu0 %604
          %vm606 = vcmask 64512
          %v607 = vsel %vm606, %v602, 0
          %v609 = vsel %vm606, %v605, 0
          %611 = vmatprep.subr.mxu0 0.0
          %612 = vmatpush1.xpose.msra.mxu0 0.0
          %613 = vmatprep.subr.mxu0 0.0
          %614 = vmatpush1.xpose.msra.mxu0 0.0
          %615 = vmatprep.subr.mxu0 0.0
          %616 = vmatpush1.xpose.msra.mxu0 0.0
          %617 = vmatprep.subr.mxu0 0.0
          %618 = vmatpush1.xpose.msra.mxu0 0.0
          %619 = vmatprep.subr.mxu0 0.0
          %620 = vmatpush1.xpose.msra.mxu0 0.0
          %621 = vmatprep.subr.mxu0 0.0
          %622 = vmatpush1.xpose.msra.mxu0 0.0
          %623 = vmatprep.subr.mxu0 0.0
          %624 = vmatpush1.xpose.msra.mxu0 0.0
          %625 = vmatprep.subr.mxu0 0.0
          %626 = vmatpush1.xpose.msra.mxu0 0.0
          %627 = vmatprep.subr.mxu0 0.0
          %628 = vmatpush1.xpose.msra.mxu0 0.0
          %629 = vmatprep.subr.mxu0 0.0
          %630 = vmatpush1.xpose.msra.mxu0 0.0
          %631 = vmatprep.subr.mxu0 0.0
          %632 = vmatpush1.xpose.msra.mxu0 0.0
          %633 = vmatprep.subr.mxu0 0.0
          %634 = vmatpush1.xpose.msra.mxu0 0.0
          %635 = vmatprep.subr.mxu0 0.0
          %636 = vmatpush1.xpose.msra.mxu0 0.0
          %637 = vmatprep.subr.mxu0 0.0
          %638 = vmatpush1.xpose.msra.mxu0 0.0
          %639 = vmatprep.subr.mxu0 0.0
          %640 = vmatpush1.xpose.msra.mxu0 0.0
          %641 = vmatprep.subr.mxu0 0.0
          %642 = vmatpush1.xpose.msra.mxu0 %v609
          %643 = vmatprep.subr.mxu0 0.0
          %644 = vmatpush2.xpose.msra.mxu0 0.0
          %645 = vmatprep.subr.mxu0 0.0
          %646 = vmatpush2.xpose.msra.mxu0 0.0
          %647 = vmatprep.subr.mxu0 0.0
          %648 = vmatpush2.xpose.msra.mxu0 0.0
          %649 = vmatprep.subr.mxu0 0.0
          %650 = vmatpush2.xpose.msra.mxu0 0.0
          %651 = vmatprep.subr.mxu0 0.0
          %652 = vmatpush2.xpose.msra.mxu0 0.0
          %653 = vmatprep.subr.mxu0 0.0
          %654 = vmatpush2.xpose.msra.mxu0 0.0
          %655 = vmatprep.subr.mxu0 0.0
          %656 = vmatpush2.xpose.msra.mxu0 0.0
          %657 = vmatprep.subr.mxu0 0.0
          %658 = vmatpush2.xpose.msra.mxu0 0.0
          %659 = vmatprep.subr.mxu0 0.0
          %660 = vmatpush2.xpose.msra.mxu0 0.0
          %661 = vmatprep.subr.mxu0 0.0
          %662 = vmatpush2.xpose.msra.mxu0 0.0
          %663 = vmatprep.subr.mxu0 0.0
          %664 = vmatpush2.xpose.msra.mxu0 0.0
          %665 = vmatprep.subr.mxu0 0.0
          %666 = vmatpush2.xpose.msra.mxu0 0.0
          %667 = vmatprep.subr.mxu0 0.0
          %668 = vmatpush2.xpose.msra.mxu0 0.0
          %669 = vmatprep.subr.mxu0 0.0
          %670 = vmatpush2.xpose.msra.mxu0 0.0
          %671 = vmatprep.subr.mxu0 0.0
          %672 = vmatpush2.xpose.msra.mxu0 0.0
          %673 = vmatprep.subr.mxu0 0.0
          %674 = vmatpush2.xpose.msra.mxu0 0.0
          %675 = vmatprep.mubr.f32.mxu0 0.0
          %676 = vmatmul.mubr.f32.gmra.mxu0 %v607
          %v677 = vpop.f32.mrf.mxu0
          %v678 = vadd.f32 0.0, %v677
          %v679 = vpop.f32.mrf.mxu0
          %680 = vdwg.mxu0
          %v681 = vsel %vm606, %v678, -inf
          %682 = vmax.xlane.f32.xlu0 %v681
          %v683 = vpop.xlane.xlu0 %682
          %v684 = vsub.f32 %v678, %v683
          %v685 = vmul.f32 %v684, 1.442695
          %v686 = vpow.pop %v685
          %v687 = vsel %vm606, %v686, 0.0
          %688 = vadd.xlane.f32.xlu0 %v687
          %v689 = vpop.xlane.xlu0 %688
          %v690 = vrcp.pop %v689
          %v691 = vmul.f32 %v686, %v690
          %v692 = vadd.f32 %v691, 0.0
          %693 = vrot.lane.b32.xlu0 %v602, 64
          %v694 = vpop.permute.xlu0 %693
          %v697 = vsel %vm606, %v691, 0
          %699 = vmatprep.subr.mxu0 0.0
          %700 = vmatpush1.msra.mxu0 0.0
          %701 = vmatprep.subr.mxu0 0.0
          %702 = vmatpush1.msra.mxu0 0.0
          %703 = vmatprep.subr.mxu0 0.0
          %704 = vmatpush1.msra.mxu0 0.0
          %705 = vmatprep.subr.mxu0 0.0
          %706 = vmatpush1.msra.mxu0 0.0
          %707 = vmatprep.subr.mxu0 0.0
          %708 = vmatpush1.msra.mxu0 0.0
          %709 = vmatprep.subr.mxu0 0.0
          %710 = vmatpush1.msra.mxu0 0.0
          %711 = vmatprep.subr.mxu0 0.0
          %712 = vmatpush1.msra.mxu0 0.0
          %713 = vmatprep.subr.mxu0 0.0
          %714 = vmatpush1.msra.mxu0 0.0
          %715 = vmatprep.subr.mxu0 0.0
          %716 = vmatpush1.msra.mxu0 0.0
          %717 = vmatprep.subr.mxu0 0.0
          %718 = vmatpush1.msra.mxu0 0.0
          %719 = vmatprep.subr.mxu0 0.0
          %720 = vmatpush1.msra.mxu0 0.0
          %721 = vmatprep.subr.mxu0 0.0
          %722 = vmatpush1.msra.mxu0 0.0
          %723 = vmatprep.subr.mxu0 0.0
          %724 = vmatpush1.msra.mxu0 0.0
          %725 = vmatprep.subr.mxu0 0.0
          %726 = vmatpush1.msra.mxu0 0.0
          %727 = vmatprep.subr.mxu0 0.0
          %728 = vmatpush1.msra.mxu0 0.0
          %729 = vmatprep.subr.mxu0 0.0
          %730 = vmatpush1.msra.mxu0 %v694
          %731 = vmatprep.subr.mxu0 0.0
          %732 = vmatpush2.msra.mxu0 0.0
          %733 = vmatprep.subr.mxu0 0.0
          %734 = vmatpush2.msra.mxu0 0.0
          %735 = vmatprep.subr.mxu0 0.0
          %736 = vmatpush2.msra.mxu0 0.0
          %737 = vmatprep.subr.mxu0 0.0
          %738 = vmatpush2.msra.mxu0 0.0
          %739 = vmatprep.subr.mxu0 0.0
          %740 = vmatpush2.msra.mxu0 0.0
          %741 = vmatprep.subr.mxu0 0.0
          %742 = vmatpush2.msra.mxu0 0.0
          %743 = vmatprep.subr.mxu0 0.0
          %744 = vmatpush2.msra.mxu0 0.0
          %745 = vmatprep.subr.mxu0 0.0
          %746 = vmatpush2.msra.mxu0 0.0
          %747 = vmatprep.subr.mxu0 0.0
          %748 = vmatpush2.msra.mxu0 0.0
          %749 = vmatprep.subr.mxu0 0.0
          %750 = vmatpush2.msra.mxu0 0.0
          %751 = vmatprep.subr.mxu0 0.0
          %752 = vmatpush2.msra.mxu0 0.0
          %753 = vmatprep.subr.mxu0 0.0
          %754 = vmatpush2.msra.mxu0 0.0
          %755 = vmatprep.subr.mxu0 0.0
          %756 = vmatpush2.msra.mxu0 0.0
          %757 = vmatprep.subr.mxu0 0.0
          %758 = vmatpush2.msra.mxu0 0.0
          %759 = vmatprep.subr.mxu0 0.0
          %760 = vmatpush2.msra.mxu0 0.0
          %761 = vmatprep.subr.mxu0 0.0
          %762 = vmatpush2.msra.mxu0 0.0
          %763 = vmatprep.mubr.f32.mxu0 0.0
          %764 = vmatmul.mubr.f32.gmra.mxu0 %v697
          %v765 = vpop.f32.mrf.mxu0
          %v766 = vadd.f32 0.0, %v765
          %v767 = vpop.f32.mrf.mxu0
          %768 = vdwg.mxu0
          %s769 = scalar_lea.vmem [#allocation3], %s600
          %770 = vst.msk [vmem:[%s769] sm:$0xff] %vm606, %v766
          %v771 = vld [vmem:[%s601] sm:$0xff]
          %773 = vrot.lane.b32.xlu0 %v771, 120
          %v774 = vpop.permute.xlu0 %773
          %775 = vrot.lane.b32.xlu0 %v771, 88
          %v776 = vpop.permute.xlu0 %775
          %v777 = vsel %vm606, %v774, 0
          %v779 = vsel %vm606, %v776, 0
          %781 = vmatprep.subr.mxu0 0.0
          %782 = vmatpush1.xpose.msra.mxu0 0.0
          %783 = vmatprep.subr.mxu0 0.0
          %784 = vmatpush1.xpose.msra.mxu0 0.0
          %785 = vmatprep.subr.mxu0 0.0
          %786 = vmatpush1.xpose.msra.mxu0 0.0
          %787 = vmatprep.subr.mxu0 0.0
          %788 = vmatpush1.xpose.msra.mxu0 0.0
          %789 = vmatprep.subr.mxu0 0.0
          %790 = vmatpush1.xpose.msra.mxu0 0.0
          %791 = vmatprep.subr.mxu0 0.0
          %792 = vmatpush1.xpose.msra.mxu0 0.0
          %793 = vmatprep.subr.mxu0 0.0
          %794 = vmatpush1.xpose.msra.mxu0 0.0
          %795 = vmatprep.subr.mxu0 0.0
          %796 = vmatpush1.xpose.msra.mxu0 0.0
          %797 = vmatprep.subr.mxu0 0.0
          %798 = vmatpush1.xpose.msra.mxu0 0.0
          %799 = vmatprep.subr.mxu0 0.0
          %800 = vmatpush1.xpose.msra.mxu0 0.0
          %801 = vmatprep.subr.mxu0 0.0
          %802 = vmatpush1.xpose.msra.mxu0 0.0
          %803 = vmatprep.subr.mxu0 0.0
          %804 = vmatpush1.xpose.msra.mxu0 0.0
          %805 = vmatprep.subr.mxu0 0.0
          %806 = vmatpush1.xpose.msra.mxu0 0.0
          %807 = vmatprep.subr.mxu0 0.0
          %808 = vmatpush1.xpose.msra.mxu0 0.0
          %809 = vmatprep.subr.mxu0 0.0
          %810 = vmatpush1.xpose.msra.mxu0 0.0
          %811 = vmatprep.subr.mxu0 0.0
          %812 = vmatpush1.xpose.msra.mxu0 %v779
          %813 = vmatprep.subr.mxu0 0.0
          %814 = vmatpush2.xpose.msra.mxu0 0.0
          %815 = vmatprep.subr.mxu0 0.0
          %816 = vmatpush2.xpose.msra.mxu0 0.0
          %817 = vmatprep.subr.mxu0 0.0
          %818 = vmatpush2.xpose.msra.mxu0 0.0
          %819 = vmatprep.subr.mxu0 0.0
          %820 = vmatpush2.xpose.msra.mxu0 0.0
          %821 = vmatprep.subr.mxu0 0.0
          %822 = vmatpush2.xpose.msra.mxu0 0.0
          %823 = vmatprep.subr.mxu0 0.0
          %824 = vmatpush2.xpose.msra.mxu0 0.0
          %825 = vmatprep.subr.mxu0 0.0
          %826 = vmatpush2.xpose.msra.mxu0 0.0
          %827 = vmatprep.subr.mxu0 0.0
          %828 = vmatpush2.xpose.msra.mxu0 0.0
          %829 = vmatprep.subr.mxu0 0.0
          %830 = vmatpush2.xpose.msra.mxu0 0.0
          %831 = vmatprep.subr.mxu0 0.0
          %832 = vmatpush2.xpose.msra.mxu0 0.0
          %833 = vmatprep.subr.mxu0 0.0
          %834 = vmatpush2.xpose.msra.mxu0 0.0
          %835 = vmatprep.subr.mxu0 0.0
          %836 = vmatpush2.xpose.msra.mxu0 0.0
          %837 = vmatprep.subr.mxu0 0.0
          %838 = vmatpush2.xpose.msra.mxu0 0.0
          %839 = vmatprep.subr.mxu0 0.0
          %840 = vmatpush2.xpose.msra.mxu0 0.0
          %841 = vmatprep.subr.mxu0 0.0
          %842 = vmatpush2.xpose.msra.mxu0 0.0
          %843 = vmatprep.subr.mxu0 0.0
          %844 = vmatpush2.xpose.msra.mxu0 0.0
          %845 = vmatprep.mubr.f32.mxu0 0.0
          %846 = vmatmul.mubr.f32.gmra.mxu0 %v777
          %v847 = vpop.f32.mrf.mxu0
          %v848 = vadd.f32 0.0, %v847
          %v849 = vpop.f32.mrf.mxu0
          %850 = vdwg.mxu0
          %v851 = vsel %vm606, %v848, -inf
          %852 = vmax.xlane.f32.xlu0 %v851
          %v853 = vpop.xlane.xlu0 %852
          %v854 = vsub.f32 %v848, %v853
          %v855 = vmul.f32 %v854, 1.442695
          %v856 = vpow.pop %v855
          %v857 = vsel %vm606, %v856, 0.0
          %858 = vadd.xlane.f32.xlu0 %v857
          %v859 = vpop.xlane.xlu0 %858
          %v860 = vrcp.pop %v859
          %v861 = vmul.f32 %v856, %v860
          %v862 = vadd.f32 %v692, %v861
          %863 = vrot.lane.b32.xlu0 %v771, 56
          %v864 = vpop.permute.xlu0 %863
          %v867 = vsel %vm606, %v861, 0
          %869 = vmatprep.subr.mxu0 0.0
          %870 = vmatpush1.msra.mxu0 0.0
          %871 = vmatprep.subr.mxu0 0.0
          %872 = vmatpush1.msra.mxu0 0.0
          %873 = vmatprep.subr.mxu0 0.0
          %874 = vmatpush1.msra.mxu0 0.0
          %875 = vmatprep.subr.mxu0 0.0
          %876 = vmatpush1.msra.mxu0 0.0
          %877 = vmatprep.subr.mxu0 0.0
          %878 = vmatpush1.msra.mxu0 0.0
          %879 = vmatprep.subr.mxu0 0.0
          %880 = vmatpush1.msra.mxu0 0.0
          %881 = vmatprep.subr.mxu0 0.0
          %882 = vmatpush1.msra.mxu0 0.0
          %883 = vmatprep.subr.mxu0 0.0
          %884 = vmatpush1.msra.mxu0 0.0
          %885 = vmatprep.subr.mxu0 0.0
          %886 = vmatpush1.msra.mxu0 0.0
          %887 = vmatprep.subr.mxu0 0.0
          %888 = vmatpush1.msra.mxu0 0.0
          %889 = vmatprep.subr.mxu0 0.0
          %890 = vmatpush1.msra.mxu0 0.0
          %891 = vmatprep.subr.mxu0 0.0
          %892 = vmatpush1.msra.mxu0 0.0
          %893 = vmatprep.subr.mxu0 0.0
          %894 = vmatpush1.msra.mxu0 0.0
          %895 = vmatprep.subr.mxu0 0.0
          %896 = vmatpush1.msra.mxu0 0.0
          %897 = vmatprep.subr.mxu0 0.0
          %898 = vmatpush1.msra.mxu0 0.0
          %899 = vmatprep.subr.mxu0 0.0
          %900 = vmatpush1.msra.mxu0 %v864
          %901 = vmatprep.subr.mxu0 0.0
          %902 = vmatpush2.msra.mxu0 0.0
          %903 = vmatprep.subr.mxu0 0.0
          %904 = vmatpush2.msra.mxu0 0.0
          %905 = vmatprep.subr.mxu0 0.0
          %906 = vmatpush2.msra.mxu0 0.0
          %907 = vmatprep.subr.mxu0 0.0
          %908 = vmatpush2.msra.mxu0 0.0
          %909 = vmatprep.subr.mxu0 0.0
          %910 = vmatpush2.msra.mxu0 0.0
          %911 = vmatprep.subr.mxu0 0.0
          %912 = vmatpush2.msra.mxu0 0.0
          %913 = vmatprep.subr.mxu0 0.0
          %914 = vmatpush2.msra.mxu0 0.0
          %915 = vmatprep.subr.mxu0 0.0
          %916 = vmatpush2.msra.mxu0 0.0
          %917 = vmatprep.subr.mxu0 0.0
          %918 = vmatpush2.msra.mxu0 0.0
          %919 = vmatprep.subr.mxu0 0.0
          %920 = vmatpush2.msra.mxu0 0.0
          %921 = vmatprep.subr.mxu0 0.0
          %922 = vmatpush2.msra.mxu0 0.0
          %923 = vmatprep.subr.mxu0 0.0
          %924 = vmatpush2.msra.mxu0 0.0
          %925 = vmatprep.subr.mxu0 0.0
          %926 = vmatpush2.msra.mxu0 0.0
          %927 = vmatprep.subr.mxu0 0.0
          %928 = vmatpush2.msra.mxu0 0.0
          %929 = vmatprep.subr.mxu0 0.0
          %930 = vmatpush2.msra.mxu0 0.0
          %931 = vmatprep.subr.mxu0 0.0
          %932 = vmatpush2.msra.mxu0 0.0
          %933 = vmatprep.mubr.f32.mxu0 0.0
          %934 = vmatmul.mubr.f32.gmra.mxu0 %v867
          %v935 = vpop.f32.mrf.mxu0
          %v936 = vadd.f32 0.0, %v935
          %v937 = vpop.f32.mrf.mxu0
          %938 = vdwg.mxu0
          %940 = vrot.lane.b32.xlu0 %v936, 8
          %v941 = vpop.permute.xlu0 %940
          %vm943 = vcmask 130112
          %944 = vst.msk [vmem:[%s769] sm:$0xff] %vm943, %v941
          %v945 = vld [vmem:[%s601] sm:$0xff]
          %947 = vrot.lane.b32.xlu0 %v945, 112
          %v948 = vpop.permute.xlu0 %947
          %949 = vrot.lane.b32.xlu0 %v945, 80
          %v950 = vpop.permute.xlu0 %949
          %v951 = vsel %vm606, %v948, 0
          %v953 = vsel %vm606, %v950, 0
          %955 = vmatprep.subr.mxu0 0.0
          %956 = vmatpush1.xpose.msra.mxu0 0.0
          %957 = vmatprep.subr.mxu0 0.0
          %958 = vmatpush1.xpose.msra.mxu0 0.0
          %959 = vmatprep.subr.mxu0 0.0
          %960 = vmatpush1.xpose.msra.mxu0 0.0
          %961 = vmatprep.subr.mxu0 0.0
          %962 = vmatpush1.xpose.msra.mxu0 0.0
          %963 = vmatprep.subr.mxu0 0.0
          %964 = vmatpush1.xpose.msra.mxu0 0.0
          %965 = vmatprep.subr.mxu0 0.0
          %966 = vmatpush1.xpose.msra.mxu0 0.0
          %967 = vmatprep.subr.mxu0 0.0
          %968 = vmatpush1.xpose.msra.mxu0 0.0
          %969 = vmatprep.subr.mxu0 0.0
          %970 = vmatpush1.xpose.msra.mxu0 0.0
          %971 = vmatprep.subr.mxu0 0.0
          %972 = vmatpush1.xpose.msra.mxu0 0.0
          %973 = vmatprep.subr.mxu0 0.0
          %974 = vmatpush1.xpose.msra.mxu0 0.0
          %975 = vmatprep.subr.mxu0 0.0
          %976 = vmatpush1.xpose.msra.mxu0 0.0
          %977 = vmatprep.subr.mxu0 0.0
          %978 = vmatpush1.xpose.msra.mxu0 0.0
          %979 = vmatprep.subr.mxu0 0.0
          %980 = vmatpush1.xpose.msra.mxu0 0.0
          %981 = vmatprep.subr.mxu0 0.0
          %982 = vmatpush1.xpose.msra.mxu0 0.0
          %983 = vmatprep.subr.mxu0 0.0
          %984 = vmatpush1.xpose.msra.mxu0 0.0
          %985 = vmatprep.subr.mxu0 0.0
          %986 = vmatpush1.xpose.msra.mxu0 %v953
          %987 = vmatprep.subr.mxu0 0.0
          %988 = vmatpush2.xpose.msra.mxu0 0.0
          %989 = vmatprep.subr.mxu0 0.0
          %990 = vmatpush2.xpose.msra.mxu0 0.0
          %991 = vmatprep.subr.mxu0 0.0
          %992 = vmatpush2.xpose.msra.mxu0 0.0
          %993 = vmatprep.subr.mxu0 0.0
          %994 = vmatpush2.xpose.msra.mxu0 0.0
          %995 = vmatprep.subr.mxu0 0.0
          %996 = vmatpush2.xpose.msra.mxu0 0.0
          %997 = vmatprep.subr.mxu0 0.0
          %998 = vmatpush2.xpose.msra.mxu0 0.0
          %999 = vmatprep.subr.mxu0 0.0
          %1000 = vmatpush2.xpose.msra.mxu0 0.0
          %1001 = vmatprep.subr.mxu0 0.0
          %1002 = vmatpush2.xpose.msra.mxu0 0.0
          %1003 = vmatprep.subr.mxu0 0.0
          %1004 = vmatpush2.xpose.msra.mxu0 0.0
          %1005 = vmatprep.subr.mxu0 0.0
          %1006 = vmatpush2.xpose.msra.mxu0 0.0
          %1007 = vmatprep.subr.mxu0 0.0
          %1008 = vmatpush2.xpose.msra.mxu0 0.0
          %1009 = vmatprep.subr.mxu0 0.0
          %1010 = vmatpush2.xpose.msra.mxu0 0.0
          %1011 = vmatprep.subr.mxu0 0.0
          %1012 = vmatpush2.xpose.msra.mxu0 0.0
          %1013 = vmatprep.subr.mxu0 0.0
          %1014 = vmatpush2.xpose.msra.mxu0 0.0
          %1015 = vmatprep.subr.mxu0 0.0
          %1016 = vmatpush2.xpose.msra.mxu0 0.0
          %1017 = vmatprep.subr.mxu0 0.0
          %1018 = vmatpush2.xpose.msra.mxu0 0.0
          %1019 = vmatprep.mubr.f32.mxu0 0.0
          %1020 = vmatmul.mubr.f32.gmra.mxu0 %v951
          %v1021 = vpop.f32.mrf.mxu0
          %v1022 = vadd.f32 0.0, %v1021
          %v1023 = vpop.f32.mrf.mxu0
          %1024 = vdwg.mxu0
          %v1025 = vsel %vm606, %v1022, -inf
          %1026 = vmax.xlane.f32.xlu0 %v1025
          %v1027 = vpop.xlane.xlu0 %1026
          %v1028 = vsub.f32 %v1022, %v1027
          %v1029 = vmul.f32 %v1028, 1.442695
          %v1030 = vpow.pop %v1029
          %v1031 = vsel %vm606, %v1030, 0.0
          %1032 = vadd.xlane.f32.xlu0 %v1031
          %v1033 = vpop.xlane.xlu0 %1032
          %v1034 = vrcp.pop %v1033
          %v1035 = vmul.f32 %v1030, %v1034
          %v1036 = vadd.f32 %v862, %v1035
          %1037 = vrot.lane.b32.xlu0 %v945, 48
          %v1038 = vpop.permute.xlu0 %1037
          %v1041 = vsel %vm606, %v1035, 0
          %1043 = vmatprep.subr.mxu0 0.0
          %1044 = vmatpush1.msra.mxu0 0.0
          %1045 = vmatprep.subr.mxu0 0.0
          %1046 = vmatpush1.msra.mxu0 0.0
          %1047 = vmatprep.subr.mxu0 0.0
          %1048 = vmatpush1.msra.mxu0 0.0
          %1049 = vmatprep.subr.mxu0 0.0
          %1050 = vmatpush1.msra.mxu0 0.0
          %1051 = vmatprep.subr.mxu0 0.0
          %1052 = vmatpush1.msra.mxu0 0.0
          %1053 = vmatprep.subr.mxu0 0.0
          %1054 = vmatpush1.msra.mxu0 0.0
          %1055 = vmatprep.subr.mxu0 0.0
          %1056 = vmatpush1.msra.mxu0 0.0
          %1057 = vmatprep.subr.mxu0 0.0
          %1058 = vmatpush1.msra.mxu0 0.0
          %1059 = vmatprep.subr.mxu0 0.0
          %1060 = vmatpush1.msra.mxu0 0.0
          %1061 = vmatprep.subr.mxu0 0.0
          %1062 = vmatpush1.msra.mxu0 0.0
          %1063 = vmatprep.subr.mxu0 0.0
          %1064 = vmatpush1.msra.mxu0 0.0
          %1065 = vmatprep.subr.mxu0 0.0
          %1066 = vmatpush1.msra.mxu0 0.0
          %1067 = vmatprep.subr.mxu0 0.0
          %1068 = vmatpush1.msra.mxu0 0.0
          %1069 = vmatprep.subr.mxu0 0.0
          %1070 = vmatpush1.msra.mxu0 0.0
          %1071 = vmatprep.subr.mxu0 0.0
          %1072 = vmatpush1.msra.mxu0 0.0
          %1073 = vmatprep.subr.mxu0 0.0
          %1074 = vmatpush1.msra.mxu0 %v1038
          %1075 = vmatprep.subr.mxu0 0.0
          %1076 = vmatpush2.msra.mxu0 0.0
          %1077 = vmatprep.subr.mxu0 0.0
          %1078 = vmatpush2.msra.mxu0 0.0
          %1079 = vmatprep.subr.mxu0 0.0
          %1080 = vmatpush2.msra.mxu0 0.0
          %1081 = vmatprep.subr.mxu0 0.0
          %1082 = vmatpush2.msra.mxu0 0.0
          %1083 = vmatprep.subr.mxu0 0.0
          %1084 = vmatpush2.msra.mxu0 0.0
          %1085 = vmatprep.subr.mxu0 0.0
          %1086 = vmatpush2.msra.mxu0 0.0
          %1087 = vmatprep.subr.mxu0 0.0
          %1088 = vmatpush2.msra.mxu0 0.0
          %1089 = vmatprep.subr.mxu0 0.0
          %1090 = vmatpush2.msra.mxu0 0.0
          %1091 = vmatprep.subr.mxu0 0.0
          %1092 = vmatpush2.msra.mxu0 0.0
          %1093 = vmatprep.subr.mxu0 0.0
          %1094 = vmatpush2.msra.mxu0 0.0
          %1095 = vmatprep.subr.mxu0 0.0
          %1096 = vmatpush2.msra.mxu0 0.0
          %1097 = vmatprep.subr.mxu0 0.0
          %1098 = vmatpush2.msra.mxu0 0.0
          %1099 = vmatprep.subr.mxu0 0.0
          %1100 = vmatpush2.msra.mxu0 0.0
          %1101 = vmatprep.subr.mxu0 0.0
          %1102 = vmatpush2.msra.mxu0 0.0
          %1103 = vmatprep.subr.mxu0 0.0
          %1104 = vmatpush2.msra.mxu0 0.0
          %1105 = vmatprep.subr.mxu0 0.0
          %1106 = vmatpush2.msra.mxu0 0.0
          %1107 = vmatprep.mubr.f32.mxu0 0.0
          %1108 = vmatmul.mubr.f32.gmra.mxu0 %v1041
          %v1109 = vpop.f32.mrf.mxu0
          %v1110 = vadd.f32 0.0, %v1109
          %v1111 = vpop.f32.mrf.mxu0
          %1112 = vdwg.mxu0
          %1114 = vrot.lane.b32.xlu0 %v1110, 16
          %v1115 = vpop.permute.xlu0 %1114
          %vm1117 = vcmask 195712
          %1118 = vst.msk [vmem:[%s769] sm:$0xff] %vm1117, %v1115
          %v1119 = vld [vmem:[%s601] sm:$0xff]
          %1121 = vrot.lane.b32.xlu0 %v1119, 104
          %v1122 = vpop.permute.xlu0 %1121
          %1123 = vrot.lane.b32.xlu0 %v1119, 72
          %v1124 = vpop.permute.xlu0 %1123
          %v1125 = vsel %vm606, %v1122, 0
          %v1127 = vsel %vm606, %v1124, 0
          %1129 = vmatprep.subr.mxu0 0.0
          %1130 = vmatpush1.xpose.msra.mxu0 0.0
          %1131 = vmatprep.subr.mxu0 0.0
          %1132 = vmatpush1.xpose.msra.mxu0 0.0
          %1133 = vmatprep.subr.mxu0 0.0
          %1134 = vmatpush1.xpose.msra.mxu0 0.0
          %1135 = vmatprep.subr.mxu0 0.0
          %1136 = vmatpush1.xpose.msra.mxu0 0.0
          %1137 = vmatprep.subr.mxu0 0.0
          %1138 = vmatpush1.xpose.msra.mxu0 0.0
          %1139 = vmatprep.subr.mxu0 0.0
          %1140 = vmatpush1.xpose.msra.mxu0 0.0
          %1141 = vmatprep.subr.mxu0 0.0
          %1142 = vmatpush1.xpose.msra.mxu0 0.0
          %1143 = vmatprep.subr.mxu0 0.0
          %1144 = vmatpush1.xpose.msra.mxu0 0.0
          %1145 = vmatprep.subr.mxu0 0.0
          %1146 = vmatpush1.xpose.msra.mxu0 0.0
          %1147 = vmatprep.subr.mxu0 0.0
          %1148 = vmatpush1.xpose.msra.mxu0 0.0
          %1149 = vmatprep.subr.mxu0 0.0
          %1150 = vmatpush1.xpose.msra.mxu0 0.0
          %1151 = vmatprep.subr.mxu0 0.0
          %1152 = vmatpush1.xpose.msra.mxu0 0.0
          %1153 = vmatprep.subr.mxu0 0.0
          %1154 = vmatpush1.xpose.msra.mxu0 0.0
          %1155 = vmatprep.subr.mxu0 0.0
          %1156 = vmatpush1.xpose.msra.mxu0 0.0
          %1157 = vmatprep.subr.mxu0 0.0
          %1158 = vmatpush1.xpose.msra.mxu0 0.0
          %1159 = vmatprep.subr.mxu0 0.0
          %1160 = vmatpush1.xpose.msra.mxu0 %v1127
          %1161 = vmatprep.subr.mxu0 0.0
          %1162 = vmatpush2.xpose.msra.mxu0 0.0
          %1163 = vmatprep.subr.mxu0 0.0
          %1164 = vmatpush2.xpose.msra.mxu0 0.0
          %1165 = vmatprep.subr.mxu0 0.0
          %1166 = vmatpush2.xpose.msra.mxu0 0.0
          %1167 = vmatprep.subr.mxu0 0.0
          %1168 = vmatpush2.xpose.msra.mxu0 0.0
          %1169 = vmatprep.subr.mxu0 0.0
          %1170 = vmatpush2.xpose.msra.mxu0 0.0
          %1171 = vmatprep.subr.mxu0 0.0
          %1172 = vmatpush2.xpose.msra.mxu0 0.0
          %1173 = vmatprep.subr.mxu0 0.0
          %1174 = vmatpush2.xpose.msra.mxu0 0.0
          %1175 = vmatprep.subr.mxu0 0.0
          %1176 = vmatpush2.xpose.msra.mxu0 0.0
          %1177 = vmatprep.subr.mxu0 0.0
          %1178 = vmatpush2.xpose.msra.mxu0 0.0
          %1179 = vmatprep.subr.mxu0 0.0
          %1180 = vmatpush2.xpose.msra.mxu0 0.0
          %1181 = vmatprep.subr.mxu0 0.0
          %1182 = vmatpush2.xpose.msra.mxu0 0.0
          %1183 = vmatprep.subr.mxu0 0.0
          %1184 = vmatpush2.xpose.msra.mxu0 0.0
          %1185 = vmatprep.subr.mxu0 0.0
          %1186 = vmatpush2.xpose.msra.mxu0 0.0
          %1187 = vmatprep.subr.mxu0 0.0
          %1188 = vmatpush2.xpose.msra.mxu0 0.0
          %1189 = vmatprep.subr.mxu0 0.0
          %1190 = vmatpush2.xpose.msra.mxu0 0.0
          %1191 = vmatprep.subr.mxu0 0.0
          %1192 = vmatpush2.xpose.msra.mxu0 0.0
          %1193 = vmatprep.mubr.f32.mxu0 0.0
          %1194 = vmatmul.mubr.f32.gmra.mxu0 %v1125
          %v1195 = vpop.f32.mrf.mxu0
          %v1196 = vadd.f32 0.0, %v1195
          %v1197 = vpop.f32.mrf.mxu0
          %1198 = vdwg.mxu0
          %v1199 = vsel %vm606, %v1196, -inf
          %1200 = vmax.xlane.f32.xlu0 %v1199
          %v1201 = vpop.xlane.xlu0 %1200
          %v1202 = vsub.f32 %v1196, %v1201
          %v1203 = vmul.f32 %v1202, 1.442695
          %v1204 = vpow.pop %v1203
          %v1205 = vsel %vm606, %v1204, 0.0
          %1206 = vadd.xlane.f32.xlu0 %v1205
          %v1207 = vpop.xlane.xlu0 %1206
          %v1208 = vrcp.pop %v1207
          %v1209 = vmul.f32 %v1204, %v1208
          %v1210 = vadd.f32 %v1036, %v1209
          %1211 = vrot.lane.b32.xlu0 %v1119, 40
          %v1212 = vpop.permute.xlu0 %1211
          %v1215 = vsel %vm606, %v1209, 0
          %1217 = vmatprep.subr.mxu0 0.0
          %1218 = vmatpush1.msra.mxu0 0.0
          %1219 = vmatprep.subr.mxu0 0.0
          %1220 = vmatpush1.msra.mxu0 0.0
          %1221 = vmatprep.subr.mxu0 0.0
          %1222 = vmatpush1.msra.mxu0 0.0
          %1223 = vmatprep.subr.mxu0 0.0
          %1224 = vmatpush1.msra.mxu0 0.0
          %1225 = vmatprep.subr.mxu0 0.0
          %1226 = vmatpush1.msra.mxu0 0.0
          %1227 = vmatprep.subr.mxu0 0.0
          %1228 = vmatpush1.msra.mxu0 0.0
          %1229 = vmatprep.subr.mxu0 0.0
          %1230 = vmatpush1.msra.mxu0 0.0
          %1231 = vmatprep.subr.mxu0 0.0
          %1232 = vmatpush1.msra.mxu0 0.0
          %1233 = vmatprep.subr.mxu0 0.0
          %1234 = vmatpush1.msra.mxu0 0.0
          %1235 = vmatprep.subr.mxu0 0.0
          %1236 = vmatpush1.msra.mxu0 0.0
          %1237 = vmatprep.subr.mxu0 0.0
          %1238 = vmatpush1.msra.mxu0 0.0
          %1239 = vmatprep.subr.mxu0 0.0
          %1240 = vmatpush1.msra.mxu0 0.0
          %1241 = vmatprep.subr.mxu0 0.0
          %1242 = vmatpush1.msra.mxu0 0.0
          %1243 = vmatprep.subr.mxu0 0.0
          %1244 = vmatpush1.msra.mxu0 0.0
          %1245 = vmatprep.subr.mxu0 0.0
          %1246 = vmatpush1.msra.mxu0 0.0
          %1247 = vmatprep.subr.mxu0 0.0
          %1248 = vmatpush1.msra.mxu0 %v1212
          %1249 = vmatprep.subr.mxu0 0.0
          %1250 = vmatpush2.msra.mxu0 0.0
          %1251 = vmatprep.subr.mxu0 0.0
          %1252 = vmatpush2.msra.mxu0 0.0
          %1253 = vmatprep.subr.mxu0 0.0
          %1254 = vmatpush2.msra.mxu0 0.0
          %1255 = vmatprep.subr.mxu0 0.0
          %1256 = vmatpush2.msra.mxu0 0.0
          %1257 = vmatprep.subr.mxu0 0.0
          %1258 = vmatpush2.msra.mxu0 0.0
          %1259 = vmatprep.subr.mxu0 0.0
          %1260 = vmatpush2.msra.mxu0 0.0
          %1261 = vmatprep.subr.mxu0 0.0
          %1262 = vmatpush2.msra.mxu0 0.0
          %1263 = vmatprep.subr.mxu0 0.0
          %1264 = vmatpush2.msra.mxu0 0.0
          %1265 = vmatprep.subr.mxu0 0.0
          %1266 = vmatpush2.msra.mxu0 0.0
          %1267 = vmatprep.subr.mxu0 0.0
          %1268 = vmatpush2.msra.mxu0 0.0
          %1269 = vmatprep.subr.mxu0 0.0
          %1270 = vmatpush2.msra.mxu0 0.0
          %1271 = vmatprep.subr.mxu0 0.0
          %1272 = vmatpush2.msra.mxu0 0.0
          %1273 = vmatprep.subr.mxu0 0.0
          %1274 = vmatpush2.msra.mxu0 0.0
          %1275 = vmatprep.subr.mxu0 0.0
          %1276 = vmatpush2.msra.mxu0 0.0
          %1277 = vmatprep.subr.mxu0 0.0
          %1278 = vmatpush2.msra.mxu0 0.0
          %1279 = vmatprep.subr.mxu0 0.0
          %1280 = vmatpush2.msra.mxu0 0.0
          %1281 = vmatprep.mubr.f32.mxu0 0.0
          %1282 = vmatmul.mubr.f32.gmra.mxu0 %v1215
          %v1283 = vpop.f32.mrf.mxu0
          %v1284 = vadd.f32 0.0, %v1283
          %v1285 = vpop.f32.mrf.mxu0
          %1286 = vdwg.mxu0
          %1288 = vrot.lane.b32.xlu0 %v1284, 24
          %v1289 = vpop.permute.xlu0 %1288
          %vm1291 = vcmask 261312
          %1292 = vst.msk [vmem:[%s769] sm:$0xff] %vm1291, %v1289
          %v1293 = vmul.f32 %v1210, 0.25
          %s1294 = scalar_lea.vmem %s487, %s600 [#allocation8]
          %1295 = vst.msk [vmem:[%s1294] sm:$0xff] %vm606, %v1293
        $region81: #{tpu_custom_call.1} parent=71 // loop_footer
          %s599 = sadd.s32 1, %s595
        $region82: #{tpu_custom_call.1} parent=71 // loop_footer_branch
          %594 = sbr.rel target = $region78
        $region83: #{tpu_custom_call.1} parent=71 // loop_exit
          _
        %v1296 = vld [vmem:[#allocation3] sm:$0xff]
        %v1297 = vld [vmem:[#allocation3 + $0x8] sm:$0xff]
        %v1298 = vld [vmem:[%s3] sm:$0xff]
        %v1299 = vld [vmem:[%s3 + $0x8] sm:$0xff]
        %v1300 = vld [vmem:[%s3 + $0x10] sm:$0xff]
        %v1301 = vld [vmem:[%s3 + $0x18] sm:$0xff]
        %v1302 = vld [vmem:[%s4] sm:$0x1]
        %v1304 = vlaneseq
        %v1305 = vshrl.u32 %v1304, 7
        %v1306 = vsub.s32 0, %v1305
        %v1307 = vrot.slane %v1302, %v1306
        %v1310 = vsel %vm509, %v1296, 0
        %v1313 = vsel %vm509, %v1297, 0
        %1315 = vmatprep.subr.mxu0 0.0
        %1316 = vmatpush1.msra.mxu0 0.0
        %1317 = vmatprep.subr.mxu0 0.0
        %1318 = vmatpush1.msra.mxu0 0.0
        %1319 = vmatprep.subr.mxu0 0.0
        %1320 = vmatpush1.msra.mxu0 0.0
        %1321 = vmatprep.subr.mxu0 0.0
        %1322 = vmatpush1.msra.mxu0 0.0
        %1323 = vmatprep.subr.mxu0 0.0
        %1324 = vmatpush1.msra.mxu0 0.0
        %1325 = vmatprep.subr.mxu0 0.0
        %1326 = vmatpush1.msra.mxu0 0.0
        %1327 = vmatprep.subr.mxu0 0.0
        %1328 = vmatpush1.msra.mxu0 0.0
        %1329 = vmatprep.subr.mxu0 0.0
        %1330 = vmatpush1.msra.mxu0 0.0
        %1331 = vmatprep.subr.mxu0 0.0
        %1332 = vmatpush1.msra.mxu0 0.0
        %1333 = vmatprep.subr.mxu0 0.0
        %1334 = vmatpush1.msra.mxu0 0.0
        %1335 = vmatprep.subr.mxu0 0.0
        %1336 = vmatpush1.msra.mxu0 0.0
        %1337 = vmatprep.subr.mxu0 0.0
        %1338 = vmatpush1.msra.mxu0 0.0
        %1339 = vmatprep.subr.mxu0 0.0
        %1340 = vmatpush1.msra.mxu0 %v1301
        %1341 = vmatprep.subr.mxu0 0.0
        %1342 = vmatpush1.msra.mxu0 %v1300
        %1343 = vmatprep.subr.mxu0 0.0
        %1344 = vmatpush1.msra.mxu0 %v1299
        %1345 = vmatprep.subr.mxu0 0.0
        %1346 = vmatpush1.msra.mxu0 %v1298
        %1347 = vmatprep.subr.mxu0 0.0
        %1348 = vmatpush2.msra.mxu0 0.0
        %1349 = vmatprep.subr.mxu0 0.0
        %1350 = vmatpush2.msra.mxu0 0.0
        %1351 = vmatprep.subr.mxu0 0.0
        %1352 = vmatpush2.msra.mxu0 0.0
        %1353 = vmatprep.subr.mxu0 0.0
        %1354 = vmatpush2.msra.mxu0 0.0
        %1355 = vmatprep.subr.mxu0 0.0
        %1356 = vmatpush2.msra.mxu0 0.0
        %1357 = vmatprep.subr.mxu0 0.0
        %1358 = vmatpush2.msra.mxu0 0.0
        %1359 = vmatprep.subr.mxu0 0.0
        %1360 = vmatpush2.msra.mxu0 0.0
        %1361 = vmatprep.subr.mxu0 0.0
        %1362 = vmatpush2.msra.mxu0 0.0
        %1363 = vmatprep.subr.mxu0 0.0
        %1364 = vmatpush2.msra.mxu0 0.0
        %1365 = vmatprep.subr.mxu0 0.0
        %1366 = vmatpush2.msra.mxu0 0.0
        %1367 = vmatprep.subr.mxu0 0.0
        %1368 = vmatpush2.msra.mxu0 0.0
        %1369 = vmatprep.subr.mxu0 0.0
        %1370 = vmatpush2.msra.mxu0 0.0
        %1371 = vmatprep.subr.mxu0 0.0
        %1372 = vmatpush2.msra.mxu0 0.0
        %1373 = vmatprep.subr.mxu0 0.0
        %1374 = vmatpush2.msra.mxu0 0.0
        %1375 = vmatprep.subr.mxu0 0.0
        %1376 = vmatpush2.msra.mxu0 0.0
        %1377 = vmatprep.subr.mxu0 0.0
        %1378 = vmatpush2.msra.mxu0 0.0
        %1379 = vmatprep.mubr.f32.mxu0 0.0
        %1380 = vmatmul.mubr.f32.gmra.mxu0 %v1310
        %v1381 = vpop.f32.mrf.mxu0
        %v1382 = vadd.f32 %v1307, %v1381
        %v1383 = vpop.f32.mrf.mxu0
        %1384 = vmatprep.mubr.f32.mxu0 0.0
        %1385 = vmatmul.mubr.f32.gmra.mxu0 %v1313
        %v1386 = vpop.f32.mrf.mxu0
        %v1387 = vadd.f32 %v1307, %v1386
        %v1388 = vpop.f32.mrf.mxu0
        %1389 = vdwg.mxu0
        %v1390 = vadd.f32 %v496, %v1382
        %v1391 = vadd.f32 %v497, %v1387
        %v1392 = vsel %vm509, %v1390, 0.0
        %1393 = vadd.xlane.f32.xlu0 %v1392
        %v1394 = vpop.xlane.xlu0 %1393
        %v1395 = vsel %vm509, %v1391, 0.0
        %1396 = vadd.xlane.f32.xlu0 %v1395
        %v1397 = vpop.xlane.xlu0 %1396
        %v1398 = vrcp.pop 32.0
        %v1399 = vmul.f32 %v1394, %v1398
        %v1400 = vmul.f32 %v1397, %v1398
        %v1401 = vmul.f32 %v1390, %v1390
        %v1402 = vmul.f32 %v1391, %v1391
        %v1403 = vsel %vm509, %v1401, 0.0
        %1404 = vadd.xlane.f32.xlu0 %v1403
        %v1405 = vpop.xlane.xlu0 %1404
        %v1406 = vsel %vm509, %v1402, 0.0
        %1407 = vadd.xlane.f32.xlu0 %v1406
        %v1408 = vpop.xlane.xlu0 %1407
        %v1409 = vmul.f32 %v1405, %v1398
        %v1410 = vmul.f32 %v1408, %v1398
        %v1411 = vmul.f32 %v1399, %v1399
        %v1412 = vmul.f32 %v1400, %v1400
        %v1413 = vsub.f32 %v1409, %v1411
        %v1414 = vsub.f32 %v1410, %v1412
        %v1415 = vsub.f32 %v1390, %v1399
        %v1416 = vsub.f32 %v1391, %v1400
        %v1417 = vadd.f32 %v1413, 1e-05
        %v1418 = vadd.f32 %v1414, 1e-05
        %v1419 = vrsqrt.pop %v1417
        %v1420 = vrsqrt.pop %v1418
        %v1421 = vmul.f32 %v1415, %v1419
        %v1422 = vmul.f32 %v1416, %v1420
        %v1423 = vld [vmem:[%s9] sm:$0x1]
        %v1425 = vlaneseq
        %v1426 = vshrl.u32 %v1425, 7
        %v1427 = vsub.s32 0, %v1426
        %v1428 = vrot.slane %v1423, %v1427
        %v1430 = vmul.f32 %v1421, %v1428
        %v1431 = vmul.f32 %v1422, %v1428
        %v1432 = vld [vmem:[%s10] sm:$0x1]
        %v1434 = vlaneseq
        %v1435 = vshrl.u32 %v1434, 7
        %v1436 = vsub.s32 0, %v1435
        %v1437 = vrot.slane %v1432, %v1436
        %v1439 = vadd.f32 %v1430, %v1437
        %v1440 = vadd.f32 %v1431, %v1437
        %v1441 = vld [vmem:[#allocation4] sm:$0xff]
        %v1442 = vld [vmem:[#allocation4 + $0x8] sm:$0xff]
        %v1443 = vld [vmem:[#allocation4 + $0x10] sm:$0xff]
        %v1444 = vld [vmem:[#allocation4 + $0x18] sm:$0xff]
        %v1445 = vld [vmem:[%s6] sm:$0x1]
        %v1447 = vlaneseq
        %v1448 = vshrl.u32 %v1447, 7
        %v1449 = vsub.s32 0, %v1448
        %v1450 = vrot.slane %v1445, %v1449
        %v1453 = vsel %vm509, %v1439, 0
        %v1456 = vsel %vm509, %v1440, 0
        %1458 = vmatprep.subr.mxu0 0.0
        %1459 = vmatpush1.msra.mxu0 0.0
        %1460 = vmatprep.subr.mxu0 0.0
        %1461 = vmatpush1.msra.mxu0 0.0
        %1462 = vmatprep.subr.mxu0 0.0
        %1463 = vmatpush1.msra.mxu0 0.0
        %1464 = vmatprep.subr.mxu0 0.0
        %1465 = vmatpush1.msra.mxu0 0.0
        %1466 = vmatprep.subr.mxu0 0.0
        %1467 = vmatpush1.msra.mxu0 0.0
        %1468 = vmatprep.subr.mxu0 0.0
        %1469 = vmatpush1.msra.mxu0 0.0
        %1470 = vmatprep.subr.mxu0 0.0
        %1471 = vmatpush1.msra.mxu0 0.0
        %1472 = vmatprep.subr.mxu0 0.0
        %1473 = vmatpush1.msra.mxu0 0.0
        %1474 = vmatprep.subr.mxu0 0.0
        %1475 = vmatpush1.msra.mxu0 0.0
        %1476 = vmatprep.subr.mxu0 0.0
        %1477 = vmatpush1.msra.mxu0 0.0
        %1478 = vmatprep.subr.mxu0 0.0
        %1479 = vmatpush1.msra.mxu0 0.0
        %1480 = vmatprep.subr.mxu0 0.0
        %1481 = vmatpush1.msra.mxu0 0.0
        %1482 = vmatprep.subr.mxu0 0.0
        %1483 = vmatpush1.msra.mxu0 %v1444
        %1484 = vmatprep.subr.mxu0 0.0
        %1485 = vmatpush1.msra.mxu0 %v1443
        %1486 = vmatprep.subr.mxu0 0.0
        %1487 = vmatpush1.msra.mxu0 %v1442
        %1488 = vmatprep.subr.mxu0 0.0
        %1489 = vmatpush1.msra.mxu0 %v1441
        %1490 = vmatprep.subr.mxu0 0.0
        %1491 = vmatpush2.msra.mxu0 0.0
        %1492 = vmatprep.subr.mxu0 0.0
        %1493 = vmatpush2.msra.mxu0 0.0
        %1494 = vmatprep.subr.mxu0 0.0
        %1495 = vmatpush2.msra.mxu0 0.0
        %1496 = vmatprep.subr.mxu0 0.0
        %1497 = vmatpush2.msra.mxu0 0.0
        %1498 = vmatprep.subr.mxu0 0.0
        %1499 = vmatpush2.msra.mxu0 0.0
        %1500 = vmatprep.subr.mxu0 0.0
        %1501 = vmatpush2.msra.mxu0 0.0
        %1502 = vmatprep.subr.mxu0 0.0
        %1503 = vmatpush2.msra.mxu0 0.0
        %1504 = vmatprep.subr.mxu0 0.0
        %1505 = vmatpush2.msra.mxu0 0.0
        %1506 = vmatprep.subr.mxu0 0.0
        %1507 = vmatpush2.msra.mxu0 0.0
        %1508 = vmatprep.subr.mxu0 0.0
        %1509 = vmatpush2.msra.mxu0 0.0
        %1510 = vmatprep.subr.mxu0 0.0
        %1511 = vmatpush2.msra.mxu0 0.0
        %1512 = vmatprep.subr.mxu0 0.0
        %1513 = vmatpush2.msra.mxu0 0.0
        %1514 = vmatprep.subr.mxu0 0.0
        %1515 = vmatpush2.msra.mxu0 0.0
        %1516 = vmatprep.subr.mxu0 0.0
        %1517 = vmatpush2.msra.mxu0 0.0
        %1518 = vmatprep.subr.mxu0 0.0
        %1519 = vmatpush2.msra.mxu0 0.0
        %1520 = vmatprep.subr.mxu0 0.0
        %1521 = vmatpush2.msra.mxu0 0.0
        %1522 = vmatprep.mubr.f32.mxu0 0.0
        %1523 = vmatmul.mubr.f32.gmra.mxu0 %v1453
        %v1524 = vpop.f32.mrf.mxu0
        %v1525 = vadd.f32 %v1450, %v1524
        %v1526 = vpop.f32.mrf.mxu0
        %1527 = vmatprep.mubr.f32.mxu0 0.0
        %1528 = vmatmul.mubr.f32.gmra.mxu0 %v1456
        %v1529 = vpop.f32.mrf.mxu0
        %v1530 = vadd.f32 %v1450, %v1529
        %v1531 = vpop.f32.mrf.mxu0
        %1532 = vdwg.mxu0
        %v1533 = vmax.f32 %v1525, 0.0
        %v1534 = vmax.f32 %v1530, 0.0
        %v1535 = vld [vmem:[%s7] sm:$0xff]
        %v1536 = vld [vmem:[%s7 + $0x8] sm:$0xff]
        %v1537 = vld [vmem:[%s7 + $0x10] sm:$0xff]
        %v1538 = vld [vmem:[%s7 + $0x18] sm:$0xff]
        %v1539 = vld [vmem:[%s7 + $0x20] sm:$0xff]
        %v1540 = vld [vmem:[%s7 + $0x28] sm:$0xff]
        %v1541 = vld [vmem:[%s7 + $0x30] sm:$0xff]
        %v1542 = vld [vmem:[%s7 + $0x38] sm:$0xff]
        %v1543 = vld [vmem:[%s8] sm:$0x1]
        %v1545 = vlaneseq
        %v1546 = vshrl.u32 %v1545, 7
        %v1547 = vsub.s32 0, %v1546
        %v1548 = vrot.slane %v1543, %v1547
        %vm1550 = vcmask 523264
        %v1552 = vsel %vm1550, %v1533, 0
        %v1555 = vsel %vm1550, %v1534, 0
        %1557 = vmatprep.subr.mxu0 0.0
        %1558 = vmatpush1.msra.mxu0 0.0
        %1559 = vmatprep.subr.mxu0 0.0
        %1560 = vmatpush1.msra.mxu0 0.0
        %1561 = vmatprep.subr.mxu0 0.0
        %1562 = vmatpush1.msra.mxu0 0.0
        %1563 = vmatprep.subr.mxu0 0.0
        %1564 = vmatpush1.msra.mxu0 0.0
        %1565 = vmatprep.subr.mxu0 0.0
        %1566 = vmatpush1.msra.mxu0 0.0
        %1567 = vmatprep.subr.mxu0 0.0
        %1568 = vmatpush1.msra.mxu0 0.0
        %1569 = vmatprep.subr.mxu0 0.0
        %1570 = vmatpush1.msra.mxu0 0.0
        %1571 = vmatprep.subr.mxu0 0.0
        %1572 = vmatpush1.msra.mxu0 0.0
        %1573 = vmatprep.subr.mxu0 0.0
        %1574 = vmatpush1.msra.mxu0 %v1542
        %1575 = vmatprep.subr.mxu0 0.0
        %1576 = vmatpush1.msra.mxu0 %v1541
        %1577 = vmatprep.subr.mxu0 0.0
        %1578 = vmatpush1.msra.mxu0 %v1540
        %1579 = vmatprep.subr.mxu0 0.0
        %1580 = vmatpush1.msra.mxu0 %v1539
        %1581 = vmatprep.subr.mxu0 0.0
        %1582 = vmatpush1.msra.mxu0 %v1538
        %1583 = vmatprep.subr.mxu0 0.0
        %1584 = vmatpush1.msra.mxu0 %v1537
        %1585 = vmatprep.subr.mxu0 0.0
        %1586 = vmatpush1.msra.mxu0 %v1536
        %1587 = vmatprep.subr.mxu0 0.0
        %1588 = vmatpush1.msra.mxu0 %v1535
        %1589 = vmatprep.subr.mxu0 0.0
        %1590 = vmatpush2.msra.mxu0 0.0
        %1591 = vmatprep.subr.mxu0 0.0
        %1592 = vmatpush2.msra.mxu0 0.0
        %1593 = vmatprep.subr.mxu0 0.0
        %1594 = vmatpush2.msra.mxu0 0.0
        %1595 = vmatprep.subr.mxu0 0.0
        %1596 = vmatpush2.msra.mxu0 0.0
        %1597 = vmatprep.subr.mxu0 0.0
        %1598 = vmatpush2.msra.mxu0 0.0
        %1599 = vmatprep.subr.mxu0 0.0
        %1600 = vmatpush2.msra.mxu0 0.0
        %1601 = vmatprep.subr.mxu0 0.0
        %1602 = vmatpush2.msra.mxu0 0.0
        %1603 = vmatprep.subr.mxu0 0.0
        %1604 = vmatpush2.msra.mxu0 0.0
        %1605 = vmatprep.subr.mxu0 0.0
        %1606 = vmatpush2.msra.mxu0 0.0
        %1607 = vmatprep.subr.mxu0 0.0
        %1608 = vmatpush2.msra.mxu0 0.0
        %1609 = vmatprep.subr.mxu0 0.0
        %1610 = vmatpush2.msra.mxu0 0.0
        %1611 = vmatprep.subr.mxu0 0.0
        %1612 = vmatpush2.msra.mxu0 0.0
        %1613 = vmatprep.subr.mxu0 0.0
        %1614 = vmatpush2.msra.mxu0 0.0
        %1615 = vmatprep.subr.mxu0 0.0
        %1616 = vmatpush2.msra.mxu0 0.0
        %1617 = vmatprep.subr.mxu0 0.0
        %1618 = vmatpush2.msra.mxu0 0.0
        %1619 = vmatprep.subr.mxu0 0.0
        %1620 = vmatpush2.msra.mxu0 0.0
        %1621 = vmatprep.mubr.f32.mxu0 0.0
        %1622 = vmatmul.mubr.f32.gmra.mxu0 %v1552
        %v1623 = vpop.f32.mrf.mxu0
        %v1624 = vadd.f32 %v1548, %v1623
        %v1625 = vpop.f32.mrf.mxu0
        %1626 = vmatprep.mubr.f32.mxu0 0.0
        %1627 = vmatmul.mubr.f32.gmra.mxu0 %v1555
        %v1628 = vpop.f32.mrf.mxu0
        %v1629 = vadd.f32 %v1548, %v1628
        %v1630 = vpop.f32.mrf.mxu0
        %1631 = vdwg.mxu0
        %v1632 = vadd.f32 %v1439, %v1624
        %v1633 = vadd.f32 %v1440, %v1629
        %v1634 = vsel %vm509, %v1632, 0.0
        %1635 = vadd.xlane.f32.xlu0 %v1634
        %v1636 = vpop.xlane.xlu0 %1635
        %v1637 = vsel %vm509, %v1633, 0.0
        %1638 = vadd.xlane.f32.xlu0 %v1637
        %v1639 = vpop.xlane.xlu0 %1638
        %v1640 = vmul.f32 %v1636, %v1398
        %v1641 = vmul.f32 %v1639, %v1398
        %v1642 = vmul.f32 %v1632, %v1632
        %v1643 = vmul.f32 %v1633, %v1633
        %v1644 = vsel %vm509, %v1642, 0.0
        %1645 = vadd.xlane.f32.xlu0 %v1644
        %v1646 = vpop.xlane.xlu0 %1645
        %v1647 = vsel %vm509, %v1643, 0.0
        %1648 = vadd.xlane.f32.xlu0 %v1647
        %v1649 = vpop.xlane.xlu0 %1648
        %v1650 = vmul.f32 %v1646, %v1398
        %v1651 = vmul.f32 %v1649, %v1398
        %v1652 = vmul.f32 %v1640, %v1640
        %v1653 = vmul.f32 %v1641, %v1641
        %v1654 = vsub.f32 %v1650, %v1652
        %v1655 = vsub.f32 %v1651, %v1653
        %v1656 = vsub.f32 %v1632, %v1640
        %v1657 = vsub.f32 %v1633, %v1641
        %v1658 = vadd.f32 %v1654, 1e-05
        %v1659 = vadd.f32 %v1655, 1e-05
        %v1660 = vrsqrt.pop %v1658
        %v1661 = vrsqrt.pop %v1659
        %v1662 = vmul.f32 %v1656, %v1660
        %v1663 = vmul.f32 %v1657, %v1661
        %v1664 = vld [vmem:[%s11] sm:$0x1]
        %v1666 = vlaneseq
        %v1667 = vshrl.u32 %v1666, 7
        %v1668 = vsub.s32 0, %v1667
        %v1669 = vrot.slane %v1664, %v1668
        %v1671 = vmul.f32 %v1662, %v1669
        %v1672 = vmul.f32 %v1663, %v1669
        %v1673 = vld [vmem:[%s12] sm:$0x1]
        %v1675 = vlaneseq
        %v1676 = vshrl.u32 %v1675, 7
        %v1677 = vsub.s32 0, %v1676
        %v1678 = vrot.slane %v1673, %v1677
        %v1680 = vadd.f32 %v1671, %v1678
        %v1681 = vadd.f32 %v1672, %v1678
        %1682 = vst.msk [vmem:[%s480] sm:$0xff] %vm509, %v1680
        %1683 = vst.msk [vmem:[%s480 + $0x8] sm:$0xff] %vm509, %v1681
        %s1684 = sand.u32 %s319, 1
        %s1685 = scalar_lea.sflag [#allocation6], %s1684
        %s1686 = sand.u32 %s319, 1
        %s1687 = smul.addr %s1686, 16
        %s1688 = scalar_lea.vmem [#allocation7], %s1687
        %s1689 = sand.u32 %s345, 1
        %s1690 = scalar_lea.sflag [#allocation9], %s1689
        %s1691 = sand.u32 %s345, 1
        %s1692 = smul.addr %s1691, 16
        %s1693 = scalar_lea.vmem [#allocation8], %s1692
        // Predicated region
        $region84: #{tpu_custom_call.1} parent=71 // pred_check
          %p1694 = pneg %p329
        $region85: #{tpu_custom_call.1} parent=71 // pred_check_branch
          %1696 = sbr.rel (%p1694) target = $region87
        $region86: #{tpu_custom_call.1} parent=71 // pred_region
          %s1697 = smul.u32 2, %s33
          %s1699 = ssub.s32 256, 256
          %1700 = vsyncadd %s1685, %s1699
          %s1701 = smul.addr %s1697, 128
          %s1702 = scalar_lea.hbm %s13, %s1701
          %s1703 = sshll.u32 %s1688, 4
          %s1704 = int_to_ptr.vmem [resolvable:$true] %s1703
          %1709 = dma.vmem_to_hbm [thread:$0]  %s1704, 256, %s1702, %s1685, 128, 128, 8
        $region87: #{tpu_custom_call.1} parent=71 // pred_fallthru
          _
        // Predicated region
        $region88: #{tpu_custom_call.1} parent=71 // pred_check
          %p1710 = pneg %p355
        $region89: #{tpu_custom_call.1} parent=71 // pred_check_branch
          %1712 = sbr.rel (%p1710) target = $region91
        $region90: #{tpu_custom_call.1} parent=71 // pred_region
          %s1713 = smul.u32 2, %s33
          %s1715 = ssub.s32 256, 256
          %1716 = vsyncadd %s1690, %s1715
          %s1717 = smul.addr %s1713, 128
          %s1718 = scalar_lea.hbm %s14, %s1717
          %s1719 = sshll.u32 %s1693, 4
          %s1720 = int_to_ptr.vmem [resolvable:$true] %s1719
          %1725 = dma.vmem_to_hbm [thread:$0]  %s1720, 256, %s1718, %s1690, 128, 128, 8
        $region91: #{tpu_custom_call.1} parent=71 // pred_fallthru
          _
      $region72: #{tpu_custom_call.1} parent=5 // pred_fallthru
        _
      %p1726 = scmp.le.s32.totalorder 2, %s28
      // Predicated region
      $region92: #{tpu_custom_call.1} parent=5 // pred_check
        %p1727 = pneg %p1726
      $region93: #{tpu_custom_call.1} parent=5 // pred_check_branch
        %1729 = sbr.rel (%p1727) target = $region95
      $region94: #{tpu_custom_call.1} parent=5 // pred_region
        %s1730 = ssub.s32 %s28, 2
        // Predicated region
        $region96: #{tpu_custom_call.1} parent=94 // pred_check
          %p1731 = pneg %p335
        $region97: #{tpu_custom_call.1} parent=94 // pred_check_branch
          %1733 = sbr.rel (%p1731) target = $region99
        $region98: #{tpu_custom_call.1} parent=94 // pred_region
          %s1734 = sand.u32 %s320, 1
          %s1735 = scalar_lea.sflag [#allocation6], %s1734
          %s1736 = sand.u32 %s320, 1
          %s1737 = smul.addr %s1736, 16
          %s1738 = scalar_lea.vmem [#allocation7], %s1737
          %1739 = dma.done %s1735, 256
        $region99: #{tpu_custom_call.1} parent=94 // pred_fallthru
          _
        // Predicated region
        $region100: #{tpu_custom_call.1} parent=94 // pred_check
          %p1740 = pneg %p361
        $region101: #{tpu_custom_call.1} parent=94 // pred_check_branch
          %1742 = sbr.rel (%p1740) target = $region103
        $region102: #{tpu_custom_call.1} parent=94 // pred_region
          %s1743 = sand.u32 %s346, 1
          %s1744 = scalar_lea.sflag [#allocation9], %s1743
          %s1745 = sand.u32 %s346, 1
          %s1746 = smul.addr %s1745, 16
          %s1747 = scalar_lea.vmem [#allocation8], %s1746
          %1748 = dma.done %s1744, 256
        $region103: #{tpu_custom_call.1} parent=94 // pred_fallthru
          _
      $region95: #{tpu_custom_call.1} parent=5 // pred_fallthru
        _
    $region6: #{tpu_custom_call.1} parent=1 // loop_footer
      %s32 = sadd.s32 1, %s28
    $region7: #{tpu_custom_call.1} parent=1 // loop_footer_branch
      %27 = sbr.rel target = $region3
    $region8: #{tpu_custom_call.1} parent=1 // loop_exit
      _
    %1749 = vsyncpa [#allocation5], 1
    %s1750 = scalar_lea.sflag [#allocation5], 1
    %1751 = vsyncpa %s1750, 1
    %1752 = vsyncpa [#allocation6], 1
    %s1753 = scalar_lea.sflag [#allocation6], 1
    %1754 = vsyncpa %s1753, 1
    %1755 = vsyncpa [#allocation9], 1
    %s1756 = scalar_lea.sflag [#allocation9], 1
    %1757 = vsyncpa %s1756, 1

</llo_original>
